<compile_context>
chip_gen: v7x
topology: tpu7x:2x2x1
jax: 0.10.0
libtpu: 0.0.40
codegen_flags: <defaults>
</compile_context>

<pallas_src>
import functools

import numpy as np
import jax
import jax.numpy as jnp
from jax.experimental import pallas as pl
from jax.experimental.pallas import tpu as pltpu


# ----------------------------------------------------------------------------
# Fused kernel
# ----------------------------------------------------------------------------
def _conv_two_kernel(x_ref, mask_ref, w1_ref, b1_ref, g1_ref, be1_ref,
                     w2_ref, b2_ref, g2_ref, be2_ref,
                     o_ref,
                     y1_s, y2_s, zpad_s, pat_s,
                     *, B, H, W, eps):
    """conv3x3 -> BN -> ReLU -> conv3x3 -> BN -> ReLU, fully in VMEM.

    Shapes (Wp = W+2, Lm = H*Wp, P = lane-padded flat length):
      x_ref    (B, Cin, P)    f32  zero-padded images, spatial flattened in lanes
      mask_ref (1, Lm)        f32  1.0 on valid output columns, 0.0 on junk cols
      w*_ref   (Cout, 9*C)    bf16 im2col weight matrices
      b*/g*/be* (Cout, 1)     f32  bias / BN gamma / BN beta
      o_ref    (B, Cout, Lm)  f32  final activation on the (H, Wp) junk grid
      y1_s/y2_s (B, Cout, Lm) f32  VMEM scratch: raw (pre-BN) conv outputs
      zpad_s   (Cout, P)      f32  VMEM scratch: re-padded stage-1 activation
      pat_s    (9*Cmax, Lm)   f32  VMEM scratch: im2col patch matrix
    """
    Wp = W + 2
    Lm = H * Wp
    offs = tuple(dy * Wp + dx for dy in range(3) for dx in range(3))
    mask = mask_ref[...]                       # (1, Lm)
    n = float(B * H * W)                       # BN normalizer (biased variance)

    def conv(inp, w_ref, b_ref):
        # inp: (C, P) f32 zero-padded flat image -> single im2col MXU matmul.
        C = inp.shape[0]
        for t, off in enumerate(offs):
            pat_s[t * C:(t + 1) * C, :] = inp[:, off:off + Lm]
        pat = pat_s[0:9 * C, :].astype(jnp.bfloat16)
        y = jnp.dot(w_ref[...], pat, preferred_element_type=jnp.float32)
        return y + b_ref[...]                  # (Cout, Lm)

    def bn_coeffs(s, q, g_ref, be_ref):
        mean = s / n
        var = jnp.maximum(q / n - mean * mean, 0.0)
        scale = g_ref[...] * jax.lax.rsqrt(var + eps)
        return scale, be_ref[...] - mean * scale

    # ---- stage 1: conv1 + single-pass BN1 moments ---------------------------
    s1 = 0.0
    q1 = 0.0
    for b in range(B):
        y1 = conv(x_ref[b], w1_ref, b1_ref)
        y1_s[b] = y1
        ym = y1 * mask
        s1 = s1 + jnp.sum(ym, axis=1, keepdims=True)
        q1 = q1 + jnp.sum(ym * y1, axis=1, keepdims=True)
    sc1, sh1 = bn_coeffs(s1, q1, g1_ref, be1_ref)

    # ---- stage 2: fused BN1 affine+ReLU -> re-pad -> conv2 + BN2 moments ----
    zpad_s[...] = jnp.zeros(zpad_s.shape, zpad_s.dtype)
    s2 = 0.0
    q2 = 0.0
    for b in range(B):
        z = jnp.maximum(sc1 * y1_s[b] + sh1, 0.0) * mask   # junk columns -> 0
        # The (H, Wp) junk grid shifted by Wp+1 is exactly the (H+2, Wp)
        # zero-padded layout: junk columns land on padding positions.
        zpad_s[:, W + 3:W + 3 + Lm] = z
        y2 = conv(zpad_s[...], w2_ref, b2_ref)
        y2_s[b] = y2
        ym = y2 * mask
        s2 = s2 + jnp.sum(ym, axis=1, keepdims=True)
        q2 = q2 + jnp.sum(ym * y2, axis=1, keepdims=True)
    sc2, sh2 = bn_coeffs(s2, q2, g2_ref, be2_ref)

    # ---- stage 3: fused BN2 affine + ReLU -> output -------------------------
    for b in range(B):
        o_ref[b] = jnp.maximum(sc2 * y2_s[b] + sh2, 0.0)


# ----------------------------------------------------------------------------
# Wrapper (PyTorch-facing: NCHW tensors, torch weight layouts)
# ----------------------------------------------------------------------------
def conv_two_forward(x_nchw, params, eps=1e-5):
    B, Cin, H, W = x_nchw.shape
    Cout = params["w1"].shape[0]
    Wp, Lm = W + 2, H * (W + 2)
    needed = (H + 2) * Wp + 2              # furthest lane any im2col tap reads
    P = ((needed + 127) // 128) * 128      # lane-tile aligned flat length

    # Wrapper-side layout plumbing: spatial zero-pad, flatten spatial into the
    # lane dimension, lane-pad with zeros to P.
    xp = jnp.pad(x_nchw, ((0, 0), (0, 0), (1, 1), (1, 1)))
    xflat = xp.reshape(B, Cin, (H + 2) * Wp).astype(jnp.float32)
    xflat = jnp.pad(xflat, ((0, 0), (0, 0), (0, P - (H + 2) * Wp)))

    def wmat(w):   # (Cout, Cin, 3, 3) -> (Cout, 9*Cin) bf16 im2col matrix
        co, ci = w.shape[0], w.shape[1]
        return jnp.transpose(w, (0, 2, 3, 1)).reshape(co, 9 * ci).astype(jnp.bfloat16)

    def col(v):    # per-channel vector -> (Cout, 1) f32
        return v.reshape(-1, 1).astype(jnp.float32)

    # Valid-column mask for the (H, W+2) junk grid.
    mask = jnp.asarray(
        (np.arange(Lm) % Wp < W).astype(np.float32).reshape(1, Lm))

    def full(shape):   # whole-array block, single grid step
        nd = len(shape)
        return pl.BlockSpec(shape, lambda i: (0,) * nd)

    Cmax = max(Cin, Cout)
    kernel = functools.partial(_conv_two_kernel, B=B, H=H, W=W, eps=eps)

    out = pl.pallas_call(
        kernel,
        out_shape=jax.ShapeDtypeStruct((B, Cout, Lm), jnp.float32),
        grid=(1,),
        in_specs=[
            full((B, Cin, P)),
            full((1, Lm)),
            full((Cout, 9 * Cin)), full((Cout, 1)), full((Cout, 1)), full((Cout, 1)),
            full((Cout, 9 * Cout)), full((Cout, 1)), full((Cout, 1)), full((Cout, 1)),
        ],
        out_specs=full((B, Cout, Lm)),
        scratch_shapes=[
            pltpu.VMEM((B, Cout, Lm), jnp.float32),    # y1 (pre-BN conv1 out)
            pltpu.VMEM((B, Cout, Lm), jnp.float32),    # y2 (pre-BN conv2 out)
            pltpu.VMEM((Cout, P), jnp.float32),        # re-padded stage-1 act
            pltpu.VMEM((9 * Cmax, Lm), jnp.float32),   # im2col patches
        ],
        compiler_params=pltpu.CompilerParams(
            dimension_semantics=("arbitrary",)),
    )(xflat, mask,
      wmat(params["w1"]), col(params["b1"]), col(params["g1"]), col(params["be1"]),
      wmat(params["w2"]), col(params["b2"]), col(params["g2"]), col(params["be2"]))

    # Drop the 2 junk columns per row; return NCHW.
    return out.reshape(B, Cout, H, Wp)[..., :W]


# ----------------------------------------------------------------------------
# Pure-JAX reference (same bf16-operand / f32-accumulation precision policy)
# ----------------------------------------------------------------------------
def conv_two_reference(x_nchw, params, eps=1e-5):
    def conv(x, w, b):
        y = jax.lax.conv_general_dilated(
            x.astype(jnp.bfloat16), w.astype(jnp.bfloat16),
            window_strides=(1, 1), padding=((1, 1), (1, 1)),
            dimension_numbers=("NCHW", "OIHW", "NCHW"),
            preferred_element_type=jnp.float32)
        return y + b.reshape(1, -1, 1, 1).astype(jnp.float32)

    def bn_relu(y, g, be):
        mean = jnp.mean(y, axis=(0, 2, 3), keepdims=True)
        var = jnp.mean((y - mean) ** 2, axis=(0, 2, 3), keepdims=True)
        yh = (y - mean) * jax.lax.rsqrt(var + eps)
        yh = yh * g.reshape(1, -1, 1, 1) + be.reshape(1, -1, 1, 1)
        return jnp.maximum(yh, 0.0)

    y = bn_relu(conv(x_nchw, params["w1"], params["b1"]), params["g1"], params["be1"])
    y = bn_relu(conv(y, params["w2"], params["b2"]), params["g2"], params["be2"])
    return y


# ----------------------------------------------------------------------------
# Main
# ----------------------------------------------------------------------------
if __name__ == "__main__":
    # conv_two(in_ch=4, out_ch=8); BatchNorm in training mode (module is never
    # .eval()'d), so batch statistics are used for normalization.
    in_ch, out_ch = 4, 8
    B, H, W = 2, 16, 16

    key = jax.random.PRNGKey(0)
    ks = jax.random.split(key, 9)
    params = {
        "w1": 0.1 * jax.random.normal(ks[0], (out_ch, in_ch, 3, 3), jnp.float32),
        "b1": 0.1 * jax.random.normal(ks[1], (out_ch,), jnp.float32),
        "g1": 1.0 + 0.1 * jax.random.normal(ks[2], (out_ch,), jnp.float32),
        "be1": 0.1 * jax.random.normal(ks[3], (out_ch,), jnp.float32),
        "w2": 0.1 * jax.random.normal(ks[4], (out_ch, out_ch, 3, 3), jnp.float32),
        "b2": 0.1 * jax.random.normal(ks[5], (out_ch,), jnp.float32),
        "g2": 1.0 + 0.1 * jax.random.normal(ks[6], (out_ch,), jnp.float32),
        "be2": 0.1 * jax.random.normal(ks[7], (out_ch,), jnp.float32),
    }
    x = jax.random.normal(ks[8], (B, in_ch, H, W), jnp.float32)

    out = jax.block_until_ready(jax.jit(conv_two_forward)(x, params))
    ref = jax.block_until_ready(conv_two_reference(x, params))

    assert out.shape == (B, out_ch, H, W), out.shape
    err = float(jnp.max(jnp.abs(out - ref)))
    assert err < 5e-3, f"max |pallas - ref| = {err}"

    print("KERNEL_OK")
</pallas_src>

<mosaic_0001>
module attributes {stable_mosaic.version = 11 : i64} {
  func.func @_conv_two_kernel(%arg0: i32, %arg1: memref<2x4x384xf32, #tpu.memory_space<vmem>>, %arg2: memref<1x288xf32, #tpu.memory_space<vmem>>, %arg3: memref<8x36xbf16, #tpu.memory_space<vmem>>, %arg4: memref<8x1xf32, #tpu.memory_space<vmem>>, %arg5: memref<8x1xf32, #tpu.memory_space<vmem>>, %arg6: memref<8x1xf32, #tpu.memory_space<vmem>>, %arg7: memref<8x72xbf16, #tpu.memory_space<vmem>>, %arg8: memref<8x1xf32, #tpu.memory_space<vmem>>, %arg9: memref<8x1xf32, #tpu.memory_space<vmem>>, %arg10: memref<8x1xf32, #tpu.memory_space<vmem>>, %arg11: memref<2x8x288xf32, #tpu.memory_space<vmem>>, %arg12: memref<2x8x288xf32, #tpu.memory_space<vmem>>, %arg13: memref<2x8x288xf32, #tpu.memory_space<vmem>>, %arg14: memref<8x384xf32, #tpu.memory_space<vmem>>, %arg15: memref<72x288xf32, #tpu.memory_space<vmem>>) attributes {dimension_semantics = [#tpu.dimension_semantics<arbitrary>], iteration_bounds = array<i64: 1>, scalar_prefetch = 0 : i64, scratch_operands = 4 : i64, tpu.core_type = #tpu.core_type<tc>, window_params = [{pipeline_mode = #tpu.pipeline_mode<synchronous>, transform_indices = @transform_0, window_bounds = array<i64: 2, 4, 384>}, {pipeline_mode = #tpu.pipeline_mode<synchronous>, transform_indices = @transform_1, window_bounds = array<i64: 1, 288>}, {pipeline_mode = #tpu.pipeline_mode<synchronous>, transform_indices = @transform_2, window_bounds = array<i64: 8, 36>}, {pipeline_mode = #tpu.pipeline_mode<synchronous>, transform_indices = @transform_3, window_bounds = array<i64: 8, 1>}, {pipeline_mode = #tpu.pipeline_mode<synchronous>, transform_indices = @transform_4, window_bounds = array<i64: 8, 1>}, {pipeline_mode = #tpu.pipeline_mode<synchronous>, transform_indices = @transform_5, window_bounds = array<i64: 8, 1>}, {pipeline_mode = #tpu.pipeline_mode<synchronous>, transform_indices = @transform_6, window_bounds = array<i64: 8, 72>}, {pipeline_mode = #tpu.pipeline_mode<synchronous>, transform_indices = @transform_7, window_bounds = array<i64: 8, 1>}, {pipeline_mode = #tpu.pipeline_mode<synchronous>, transform_indices = @transform_8, window_bounds = array<i64: 8, 1>}, {pipeline_mode = #tpu.pipeline_mode<synchronous>, transform_indices = @transform_9, window_bounds = array<i64: 8, 1>}, {pipeline_mode = #tpu.pipeline_mode<synchronous>, transform_indices = @transform_10, window_bounds = array<i64: 2, 8, 288>}]} {
    %c0 = arith.constant 0 : index
    %c0_0 = arith.constant 0 : index
    %0 = vector.load %arg2[%c0, %c0_0] : memref<1x288xf32, #tpu.memory_space<vmem>>, vector<1x288xf32>
    %c0_1 = arith.constant 0 : index
    %c0_2 = arith.constant 0 : index
    %c0_3 = arith.constant 0 : index
    %1 = vector.load %arg1[%c0_1, %c0_2, %c0_3] : memref<2x4x384xf32, #tpu.memory_space<vmem>>, vector<1x4x384xf32>
    %2 = vector.shape_cast %1 : vector<1x4x384xf32> to vector<4x384xf32>
    %3 = vector.extract_strided_slice %2 {offsets = [0, 0], sizes = [4, 288], strides = [1, 1]} : vector<4x384xf32> to vector<4x288xf32>
    %c0_4 = arith.constant 0 : index
    %c0_5 = arith.constant 0 : index
    %4 = vector.load %arg15[%c0_4, %c0_5] : memref<72x288xf32, #tpu.memory_space<vmem>>, vector<4x288xf32>
    tpu.vector_store %arg15[%c0_4, %c0_5], %3 {strides = array<i32>} : memref<72x288xf32, #tpu.memory_space<vmem>>, vector<4x288xf32>,
    %5 = vector.extract_strided_slice %2 {offsets = [0, 1], sizes = [4, 288], strides = [1, 1]} : vector<4x384xf32> to vector<4x288xf32>
    %c4 = arith.constant 4 : index
    %c0_6 = arith.constant 0 : index
    %6 = vector.load %arg15[%c4, %c0_6] : memref<72x288xf32, #tpu.memory_space<vmem>>, vector<4x288xf32>
    tpu.vector_store %arg15[%c4, %c0_6], %5 {strides = array<i32>} : memref<72x288xf32, #tpu.memory_space<vmem>>, vector<4x288xf32>,
    %7 = vector.extract_strided_slice %2 {offsets = [0, 2], sizes = [4, 288], strides = [1, 1]} : vector<4x384xf32> to vector<4x288xf32>
    %c8 = arith.constant 8 : index
    %c0_7 = arith.constant 0 : index
    %8 = vector.load %arg15[%c8, %c0_7] : memref<72x288xf32, #tpu.memory_space<vmem>>, vector<4x288xf32>
    tpu.vector_store %arg15[%c8, %c0_7], %7 {strides = array<i32>} : memref<72x288xf32, #tpu.memory_space<vmem>>, vector<4x288xf32>,
    %9 = vector.extract_strided_slice %2 {offsets = [0, 18], sizes = [4, 288], strides = [1, 1]} : vector<4x384xf32> to vector<4x288xf32>
    %c12 = arith.constant 12 : index
    %c0_8 = arith.constant 0 : index
    %10 = vector.load %arg15[%c12, %c0_8] : memref<72x288xf32, #tpu.memory_space<vmem>>, vector<4x288xf32>
    tpu.vector_store %arg15[%c12, %c0_8], %9 {strides = array<i32>} : memref<72x288xf32, #tpu.memory_space<vmem>>, vector<4x288xf32>,
    %11 = vector.extract_strided_slice %2 {offsets = [0, 19], sizes = [4, 288], strides = [1, 1]} : vector<4x384xf32> to vector<4x288xf32>
    %c16 = arith.constant 16 : index
    %c0_9 = arith.constant 0 : index
    %12 = vector.load %arg15[%c16, %c0_9] : memref<72x288xf32, #tpu.memory_space<vmem>>, vector<4x288xf32>
    tpu.vector_store %arg15[%c16, %c0_9], %11 {strides = array<i32>} : memref<72x288xf32, #tpu.memory_space<vmem>>, vector<4x288xf32>,
    %13 = vector.extract_strided_slice %2 {offsets = [0, 20], sizes = [4, 288], strides = [1, 1]} : vector<4x384xf32> to vector<4x288xf32>
    %c20 = arith.constant 20 : index
    %c0_10 = arith.constant 0 : index
    %14 = vector.load %arg15[%c20, %c0_10] : memref<72x288xf32, #tpu.memory_space<vmem>>, vector<4x288xf32>
    tpu.vector_store %arg15[%c20, %c0_10], %13 {strides = array<i32>} : memref<72x288xf32, #tpu.memory_space<vmem>>, vector<4x288xf32>,
    %15 = vector.extract_strided_slice %2 {offsets = [0, 36], sizes = [4, 288], strides = [1, 1]} : vector<4x384xf32> to vector<4x288xf32>
    %c24 = arith.constant 24 : index
    %c0_11 = arith.constant 0 : index
    %16 = vector.load %arg15[%c24, %c0_11] : memref<72x288xf32, #tpu.memory_space<vmem>>, vector<4x288xf32>
    tpu.vector_store %arg15[%c24, %c0_11], %15 {strides = array<i32>} : memref<72x288xf32, #tpu.memory_space<vmem>>, vector<4x288xf32>,
    %17 = vector.extract_strided_slice %2 {offsets = [0, 37], sizes = [4, 288], strides = [1, 1]} : vector<4x384xf32> to vector<4x288xf32>
    %c28 = arith.constant 28 : index
    %c0_12 = arith.constant 0 : index
    %18 = vector.load %arg15[%c28, %c0_12] : memref<72x288xf32, #tpu.memory_space<vmem>>, vector<4x288xf32>
    tpu.vector_store %arg15[%c28, %c0_12], %17 {strides = array<i32>} : memref<72x288xf32, #tpu.memory_space<vmem>>, vector<4x288xf32>,
    %19 = vector.extract_strided_slice %2 {offsets = [0, 38], sizes = [4, 288], strides = [1, 1]} : vector<4x384xf32> to vector<4x288xf32>
    %c32 = arith.constant 32 : index
    %c0_13 = arith.constant 0 : index
    %20 = vector.load %arg15[%c32, %c0_13] : memref<72x288xf32, #tpu.memory_space<vmem>>, vector<4x288xf32>
    tpu.vector_store %arg15[%c32, %c0_13], %19 {strides = array<i32>} : memref<72x288xf32, #tpu.memory_space<vmem>>, vector<4x288xf32>,
    %c0_14 = arith.constant 0 : index
    %c0_15 = arith.constant 0 : index
    %21 = vector.load %arg15[%c0_14, %c0_15] : memref<72x288xf32, #tpu.memory_space<vmem>>, vector<36x288xf32>
    %22 = arith.truncf %21 : vector<36x288xf32> to vector<36x288xbf16>
    %c0_16 = arith.constant 0 : index
    %c0_17 = arith.constant 0 : index
    %23 = vector.load %arg3[%c0_16, %c0_17] : memref<8x36xbf16, #tpu.memory_space<vmem>>, vector<8x36xbf16>
    %cst = arith.constant dense<0.000000e+00> : vector<8x288xf32>
    %24 = tpu.matmul %23, %22, %cst {dimension_numbers = #tpu.dot_dimension_numbers<[1], [0], [0], [1], [0, 0, 1, 1], [], []>} : vector<8x36xbf16>, vector<36x288xbf16>, vector<8x288xf32> -> vector<8x288xf32>
    %c0_18 = arith.constant 0 : index
    %c0_19 = arith.constant 0 : index
    %25 = vector.load %arg4[%c0_18, %c0_19] : memref<8x1xf32, #tpu.memory_space<vmem>>, vector<8x1xf32>
    %26 = vector.broadcast %25 : vector<8x1xf32> to vector<8x288xf32>
    %27 = arith.addf %24, %26 : vector<8x288xf32>
    %c0_20 = arith.constant 0 : index
    %c0_21 = arith.constant 0 : index
    %c0_22 = arith.constant 0 : index
    %28 = vector.load %arg12[%c0_20, %c0_21, %c0_22] : memref<2x8x288xf32, #tpu.memory_space<vmem>>, vector<1x8x288xf32>
    %29 = vector.shape_cast %28 : vector<1x8x288xf32> to vector<8x288xf32>
    %30 = vector.shape_cast %27 : vector<8x288xf32> to vector<1x8x288xf32>
    tpu.vector_store %arg12[%c0_20, %c0_21, %c0_22], %30 {strides = array<i32>} : memref<2x8x288xf32, #tpu.memory_space<vmem>>, vector<1x8x288xf32>,
    %31 = vector.broadcast %0 : vector<1x288xf32> to vector<8x288xf32>
    %32 = arith.mulf %27, %31 : vector<8x288xf32>
    %cst_23 = arith.constant dense<0.000000e+00> : vector<8xf32>
    %33 = vector.multi_reduction <add>, %32, %cst_23 [1] : vector<8x288xf32> to vector<8xf32>
    %34 = vector.shape_cast %33 : vector<8xf32> to vector<8x1xf32>
    %cst_24 = arith.constant 0.000000e+00 : f32
    %35 = vector.broadcast %cst_24 : f32 to vector<8x1xf32>
    %36 = arith.addf %35, %34 : vector<8x1xf32>
    %37 = arith.mulf %32, %27 : vector<8x288xf32>
    %cst_25 = arith.constant dense<0.000000e+00> : vector<8xf32>
    %38 = vector.multi_reduction <add>, %37, %cst_25 [1] : vector<8x288xf32> to vector<8xf32>
    %39 = vector.shape_cast %38 : vector<8xf32> to vector<8x1xf32>
    %cst_26 = arith.constant 0.000000e+00 : f32
    %40 = vector.broadcast %cst_26 : f32 to vector<8x1xf32>
    %41 = arith.addf %40, %39 : vector<8x1xf32>
    %c1 = arith.constant 1 : index
    %c0_27 = arith.constant 0 : index
    %c0_28 = arith.constant 0 : index
    %42 = vector.load %arg1[%c1, %c0_27, %c0_28] : memref<2x4x384xf32, #tpu.memory_space<vmem>>, vector<1x4x384xf32>
    %43 = vector.shape_cast %42 : vector<1x4x384xf32> to vector<4x384xf32>
    %44 = vector.extract_strided_slice %43 {offsets = [0, 0], sizes = [4, 288], strides = [1, 1]} : vector<4x384xf32> to vector<4x288xf32>
    %c0_29 = arith.constant 0 : index
    %c0_30 = arith.constant 0 : index
    %45 = vector.load %arg15[%c0_29, %c0_30] : memref<72x288xf32, #tpu.memory_space<vmem>>, vector<4x288xf32>
    tpu.vector_store %arg15[%c0_29, %c0_30], %44 {strides = array<i32>} : memref<72x288xf32, #tpu.memory_space<vmem>>, vector<4x288xf32>,
    %46 = vector.extract_strided_slice %43 {offsets = [0, 1], sizes = [4, 288], strides = [1, 1]} : vector<4x384xf32> to vector<4x288xf32>
    %c4_31 = arith.constant 4 : index
    %c0_32 = arith.constant 0 : index
    %47 = vector.load %arg15[%c4_31, %c0_32] : memref<72x288xf32, #tpu.memory_space<vmem>>, vector<4x288xf32>
    tpu.vector_store %arg15[%c4_31, %c0_32], %46 {strides = array<i32>} : memref<72x288xf32, #tpu.memory_space<vmem>>, vector<4x288xf32>,
    %48 = vector.extract_strided_slice %43 {offsets = [0, 2], sizes = [4, 288], strides = [1, 1]} : vector<4x384xf32> to vector<4x288xf32>
    %c8_33 = arith.constant 8 : index
    %c0_34 = arith.constant 0 : index
    %49 = vector.load %arg15[%c8_33, %c0_34] : memref<72x288xf32, #tpu.memory_space<vmem>>, vector<4x288xf32>
    tpu.vector_store %arg15[%c8_33, %c0_34], %48 {strides = array<i32>} : memref<72x288xf32, #tpu.memory_space<vmem>>, vector<4x288xf32>,
    %50 = vector.extract_strided_slice %43 {offsets = [0, 18], sizes = [4, 288], strides = [1, 1]} : vector<4x384xf32> to vector<4x288xf32>
    %c12_35 = arith.constant 12 : index
    %c0_36 = arith.constant 0 : index
    %51 = vector.load %arg15[%c12_35, %c0_36] : memref<72x288xf32, #tpu.memory_space<vmem>>, vector<4x288xf32>
    tpu.vector_store %arg15[%c12_35, %c0_36], %50 {strides = array<i32>} : memref<72x288xf32, #tpu.memory_space<vmem>>, vector<4x288xf32>,
    %52 = vector.extract_strided_slice %43 {offsets = [0, 19], sizes = [4, 288], strides = [1, 1]} : vector<4x384xf32> to vector<4x288xf32>
    %c16_37 = arith.constant 16 : index
    %c0_38 = arith.constant 0 : index
    %53 = vector.load %arg15[%c16_37, %c0_38] : memref<72x288xf32, #tpu.memory_space<vmem>>, vector<4x288xf32>
    tpu.vector_store %arg15[%c16_37, %c0_38], %52 {strides = array<i32>} : memref<72x288xf32, #tpu.memory_space<vmem>>, vector<4x288xf32>,
    %54 = vector.extract_strided_slice %43 {offsets = [0, 20], sizes = [4, 288], strides = [1, 1]} : vector<4x384xf32> to vector<4x288xf32>
    %c20_39 = arith.constant 20 : index
    %c0_40 = arith.constant 0 : index
    %55 = vector.load %arg15[%c20_39, %c0_40] : memref<72x288xf32, #tpu.memory_space<vmem>>, vector<4x288xf32>
    tpu.vector_store %arg15[%c20_39, %c0_40], %54 {strides = array<i32>} : memref<72x288xf32, #tpu.memory_space<vmem>>, vector<4x288xf32>,
    %56 = vector.extract_strided_slice %43 {offsets = [0, 36], sizes = [4, 288], strides = [1, 1]} : vector<4x384xf32> to vector<4x288xf32>
    %c24_41 = arith.constant 24 : index
    %c0_42 = arith.constant 0 : index
    %57 = vector.load %arg15[%c24_41, %c0_42] : memref<72x288xf32, #tpu.memory_space<vmem>>, vector<4x288xf32>
    tpu.vector_store %arg15[%c24_41, %c0_42], %56 {strides = array<i32>} : memref<72x288xf32, #tpu.memory_space<vmem>>, vector<4x288xf32>,
    %58 = vector.extract_strided_slice %43 {offsets = [0, 37], sizes = [4, 288], strides = [1, 1]} : vector<4x384xf32> to vector<4x288xf32>
    %c28_43 = arith.constant 28 : index
    %c0_44 = arith.constant 0 : index
    %59 = vector.load %arg15[%c28_43, %c0_44] : memref<72x288xf32, #tpu.memory_space<vmem>>, vector<4x288xf32>
    tpu.vector_store %arg15[%c28_43, %c0_44], %58 {strides = array<i32>} : memref<72x288xf32, #tpu.memory_space<vmem>>, vector<4x288xf32>,
    %60 = vector.extract_strided_slice %43 {offsets = [0, 38], sizes = [4, 288], strides = [1, 1]} : vector<4x384xf32> to vector<4x288xf32>
    %c32_45 = arith.constant 32 : index
    %c0_46 = arith.constant 0 : index
    %61 = vector.load %arg15[%c32_45, %c0_46] : memref<72x288xf32, #tpu.memory_space<vmem>>, vector<4x288xf32>
    tpu.vector_store %arg15[%c32_45, %c0_46], %60 {strides = array<i32>} : memref<72x288xf32, #tpu.memory_space<vmem>>, vector<4x288xf32>,
    %c0_47 = arith.constant 0 : index
    %c0_48 = arith.constant 0 : index
    %62 = vector.load %arg15[%c0_47, %c0_48] : memref<72x288xf32, #tpu.memory_space<vmem>>, vector<36x288xf32>
    %63 = arith.truncf %62 : vector<36x288xf32> to vector<36x288xbf16>
    %c0_49 = arith.constant 0 : index
    %c0_50 = arith.constant 0 : index
    %64 = vector.load %arg3[%c0_49, %c0_50] : memref<8x36xbf16, #tpu.memory_space<vmem>>, vector<8x36xbf16>
    %cst_51 = arith.constant dense<0.000000e+00> : vector<8x288xf32>
    %65 = tpu.matmul %64, %63, %cst_51 {dimension_numbers = #tpu.dot_dimension_numbers<[1], [0], [0], [1], [0, 0, 1, 1], [], []>} : vector<8x36xbf16>, vector<36x288xbf16>, vector<8x288xf32> -> vector<8x288xf32>
    %c0_52 = arith.constant 0 : index
    %c0_53 = arith.constant 0 : index
    %66 = vector.load %arg4[%c0_52, %c0_53] : memref<8x1xf32, #tpu.memory_space<vmem>>, vector<8x1xf32>
    %67 = vector.broadcast %66 : vector<8x1xf32> to vector<8x288xf32>
    %68 = arith.addf %65, %67 : vector<8x288xf32>
    %c1_54 = arith.constant 1 : index
    %c0_55 = arith.constant 0 : index
    %c0_56 = arith.constant 0 : index
    %69 = vector.load %arg12[%c1_54, %c0_55, %c0_56] : memref<2x8x288xf32, #tpu.memory_space<vmem>>, vector<1x8x288xf32>
    %70 = vector.shape_cast %69 : vector<1x8x288xf32> to vector<8x288xf32>
    %71 = vector.shape_cast %68 : vector<8x288xf32> to vector<1x8x288xf32>
    tpu.vector_store %arg12[%c1_54, %c0_55, %c0_56], %71 {strides = array<i32>} : memref<2x8x288xf32, #tpu.memory_space<vmem>>, vector<1x8x288xf32>,
    %72 = vector.broadcast %0 : vector<1x288xf32> to vector<8x288xf32>
    %73 = arith.mulf %68, %72 : vector<8x288xf32>
    %cst_57 = arith.constant dense<0.000000e+00> : vector<8xf32>
    %74 = vector.multi_reduction <add>, %73, %cst_57 [1] : vector<8x288xf32> to vector<8xf32>
    %75 = vector.shape_cast %74 : vector<8xf32> to vector<8x1xf32>
    %76 = arith.addf %36, %75 : vector<8x1xf32>
    %77 = arith.mulf %73, %68 : vector<8x288xf32>
    %cst_58 = arith.constant dense<0.000000e+00> : vector<8xf32>
    %78 = vector.multi_reduction <add>, %77, %cst_58 [1] : vector<8x288xf32> to vector<8xf32>
    %79 = vector.shape_cast %78 : vector<8xf32> to vector<8x1xf32>
    %80 = arith.addf %41, %79 : vector<8x1xf32>
    %cst_59 = arith.constant 5.120000e+02 : f32
    %81 = vector.broadcast %cst_59 : f32 to vector<8x1xf32>
    %82 = arith.divf %76, %81 : vector<8x1xf32>
    %cst_60 = arith.constant 5.120000e+02 : f32
    %83 = vector.broadcast %cst_60 : f32 to vector<8x1xf32>
    %84 = arith.divf %80, %83 : vector<8x1xf32>
    %85 = arith.mulf %82, %82 : vector<8x1xf32>
    %86 = arith.subf %84, %85 : vector<8x1xf32>
    %cst_61 = arith.constant 0.000000e+00 : f32
    %87 = vector.broadcast %cst_61 : f32 to vector<8x1xf32>
    %88 = arith.maximumf %86, %87 : vector<8x1xf32>
    %c0_62 = arith.constant 0 : index
    %c0_63 = arith.constant 0 : index
    %89 = vector.load %arg5[%c0_62, %c0_63] : memref<8x1xf32, #tpu.memory_space<vmem>>, vector<8x1xf32>
    %cst_64 = arith.constant 9.99999974E-6 : f32
    %90 = vector.broadcast %cst_64 : f32 to vector<8x1xf32>
    %91 = arith.addf %88, %90 : vector<8x1xf32>
    %92 = math.rsqrt %91 : vector<8x1xf32>
    %93 = arith.mulf %89, %92 : vector<8x1xf32>
    %c0_65 = arith.constant 0 : index
    %c0_66 = arith.constant 0 : index
    %94 = vector.load %arg6[%c0_65, %c0_66] : memref<8x1xf32, #tpu.memory_space<vmem>>, vector<8x1xf32>
    %95 = arith.mulf %82, %93 : vector<8x1xf32>
    %96 = arith.subf %94, %95 : vector<8x1xf32>
    %cst_67 = arith.constant 0.000000e+00 : f32
    %97 = vector.broadcast %cst_67 : f32 to vector<8x384xf32>
    %c0_68 = arith.constant 0 : index
    %c0_69 = arith.constant 0 : index
    %98 = vector.load %arg14[%c0_68, %c0_69] : memref<8x384xf32, #tpu.memory_space<vmem>>, vector<8x384xf32>
    tpu.vector_store %arg14[%c0_68, %c0_69], %97 {strides = array<i32>} : memref<8x384xf32, #tpu.memory_space<vmem>>, vector<8x384xf32>,
    %c0_70 = arith.constant 0 : index
    %c0_71 = arith.constant 0 : index
    %c0_72 = arith.constant 0 : index
    %99 = vector.load %arg12[%c0_70, %c0_71, %c0_72] : memref<2x8x288xf32, #tpu.memory_space<vmem>>, vector<1x8x288xf32>
    %100 = vector.shape_cast %99 : vector<1x8x288xf32> to vector<8x288xf32>
    %101 = vector.broadcast %93 : vector<8x1xf32> to vector<8x288xf32>
    %102 = arith.mulf %101, %100 : vector<8x288xf32>
    %103 = vector.broadcast %96 : vector<8x1xf32> to vector<8x288xf32>
    %104 = arith.addf %102, %103 : vector<8x288xf32>
    %cst_73 = arith.constant 0.000000e+00 : f32
    %105 = vector.broadcast %cst_73 : f32 to vector<8x288xf32>
    %106 = arith.maximumf %104, %105 : vector<8x288xf32>
    %107 = vector.broadcast %0 : vector<1x288xf32> to vector<8x288xf32>
    %108 = arith.mulf %106, %107 : vector<8x288xf32>
    %c0_74 = arith.constant 0 : index
    %c19 = arith.constant 19 : index
    %109 = vector.load %arg14[%c0_74, %c19] : memref<8x384xf32, #tpu.memory_space<vmem>>, vector<8x288xf32>
    tpu.vector_store %arg14[%c0_74, %c19], %108 {strides = array<i32>} : memref<8x384xf32, #tpu.memory_space<vmem>>, vector<8x288xf32>,
    %c0_75 = arith.constant 0 : index
    %c0_76 = arith.constant 0 : index
    %110 = vector.load %arg14[%c0_75, %c0_76] : memref<8x384xf32, #tpu.memory_space<vmem>>, vector<8x384xf32>
    %111 = vector.extract_strided_slice %110 {offsets = [0, 0], sizes = [8, 288], strides = [1, 1]} : vector<8x384xf32> to vector<8x288xf32>
    %c0_77 = arith.constant 0 : index
    %c0_78 = arith.constant 0 : index
    %112 = vector.load %arg15[%c0_77, %c0_78] : memref<72x288xf32, #tpu.memory_space<vmem>>, vector<8x288xf32>
    tpu.vector_store %arg15[%c0_77, %c0_78], %111 {strides = array<i32>} : memref<72x288xf32, #tpu.memory_space<vmem>>, vector<8x288xf32>,
    %113 = vector.extract_strided_slice %110 {offsets = [0, 1], sizes = [8, 288], strides = [1, 1]} : vector<8x384xf32> to vector<8x288xf32>
    %c8_79 = arith.constant 8 : index
    %c0_80 = arith.constant 0 : index
    %114 = vector.load %arg15[%c8_79, %c0_80] : memref<72x288xf32, #tpu.memory_space<vmem>>, vector<8x288xf32>
    tpu.vector_store %arg15[%c8_79, %c0_80], %113 {strides = array<i32>} : memref<72x288xf32, #tpu.memory_space<vmem>>, vector<8x288xf32>,
    %115 = vector.extract_strided_slice %110 {offsets = [0, 2], sizes = [8, 288], strides = [1, 1]} : vector<8x384xf32> to vector<8x288xf32>
    %c16_81 = arith.constant 16 : index
    %c0_82 = arith.constant 0 : index
    %116 = vector.load %arg15[%c16_81, %c0_82] : memref<72x288xf32, #tpu.memory_space<vmem>>, vector<8x288xf32>
    tpu.vector_store %arg15[%c16_81, %c0_82], %115 {strides = array<i32>} : memref<72x288xf32, #tpu.memory_space<vmem>>, vector<8x288xf32>,
    %117 = vector.extract_strided_slice %110 {offsets = [0, 18], sizes = [8, 288], strides = [1, 1]} : vector<8x384xf32> to vector<8x288xf32>
    %c24_83 = arith.constant 24 : index
    %c0_84 = arith.constant 0 : index
    %118 = vector.load %arg15[%c24_83, %c0_84] : memref<72x288xf32, #tpu.memory_space<vmem>>, vector<8x288xf32>
    tpu.vector_store %arg15[%c24_83, %c0_84], %117 {strides = array<i32>} : memref<72x288xf32, #tpu.memory_space<vmem>>, vector<8x288xf32>,
    %119 = vector.extract_strided_slice %110 {offsets = [0, 19], sizes = [8, 288], strides = [1, 1]} : vector<8x384xf32> to vector<8x288xf32>
    %c32_85 = arith.constant 32 : index
    %c0_86 = arith.constant 0 : index
    %120 = vector.load %arg15[%c32_85, %c0_86] : memref<72x288xf32, #tpu.memory_space<vmem>>, vector<8x288xf32>
    tpu.vector_store %arg15[%c32_85, %c0_86], %119 {strides = array<i32>} : memref<72x288xf32, #tpu.memory_space<vmem>>, vector<8x288xf32>,
    %121 = vector.extract_strided_slice %110 {offsets = [0, 20], sizes = [8, 288], strides = [1, 1]} : vector<8x384xf32> to vector<8x288xf32>
    %c40 = arith.constant 40 : index
    %c0_87 = arith.constant 0 : index
    %122 = vector.load %arg15[%c40, %c0_87] : memref<72x288xf32, #tpu.memory_space<vmem>>, vector<8x288xf32>
    tpu.vector_store %arg15[%c40, %c0_87], %121 {strides = array<i32>} : memref<72x288xf32, #tpu.memory_space<vmem>>, vector<8x288xf32>,
    %123 = vector.extract_strided_slice %110 {offsets = [0, 36], sizes = [8, 288], strides = [1, 1]} : vector<8x384xf32> to vector<8x288xf32>
    %c48 = arith.constant 48 : index
    %c0_88 = arith.constant 0 : index
    %124 = vector.load %arg15[%c48, %c0_88] : memref<72x288xf32, #tpu.memory_space<vmem>>, vector<8x288xf32>
    tpu.vector_store %arg15[%c48, %c0_88], %123 {strides = array<i32>} : memref<72x288xf32, #tpu.memory_space<vmem>>, vector<8x288xf32>,
    %125 = vector.extract_strided_slice %110 {offsets = [0, 37], sizes = [8, 288], strides = [1, 1]} : vector<8x384xf32> to vector<8x288xf32>
    %c56 = arith.constant 56 : index
    %c0_89 = arith.constant 0 : index
    %126 = vector.load %arg15[%c56, %c0_89] : memref<72x288xf32, #tpu.memory_space<vmem>>, vector<8x288xf32>
    tpu.vector_store %arg15[%c56, %c0_89], %125 {strides = array<i32>} : memref<72x288xf32, #tpu.memory_space<vmem>>, vector<8x288xf32>,
    %127 = vector.extract_strided_slice %110 {offsets = [0, 38], sizes = [8, 288], strides = [1, 1]} : vector<8x384xf32> to vector<8x288xf32>
    %c64 = arith.constant 64 : index
    %c0_90 = arith.constant 0 : index
    %128 = vector.load %arg15[%c64, %c0_90] : memref<72x288xf32, #tpu.memory_space<vmem>>, vector<8x288xf32>
    tpu.vector_store %arg15[%c64, %c0_90], %127 {strides = array<i32>} : memref<72x288xf32, #tpu.memory_space<vmem>>, vector<8x288xf32>,
    %c0_91 = arith.constant 0 : index
    %c0_92 = arith.constant 0 : index
    %129 = vector.load %arg15[%c0_91, %c0_92] : memref<72x288xf32, #tpu.memory_space<vmem>>, vector<72x288xf32>
    %130 = arith.truncf %129 : vector<72x288xf32> to vector<72x288xbf16>
    %c0_93 = arith.constant 0 : index
    %c0_94 = arith.constant 0 : index
    %131 = vector.load %arg7[%c0_93, %c0_94] : memref<8x72xbf16, #tpu.memory_space<vmem>>, vector<8x72xbf16>
    %cst_95 = arith.constant dense<0.000000e+00> : vector<8x288xf32>
    %132 = tpu.matmul %131, %130, %cst_95 {dimension_numbers = #tpu.dot_dimension_numbers<[1], [0], [0], [1], [0, 0, 1, 1], [], []>} : vector<8x72xbf16>, vector<72x288xbf16>, vector<8x288xf32> -> vector<8x288xf32>
    %c0_96 = arith.constant 0 : index
    %c0_97 = arith.constant 0 : index
    %133 = vector.load %arg8[%c0_96, %c0_97] : memref<8x1xf32, #tpu.memory_space<vmem>>, vector<8x1xf32>
    %134 = vector.broadcast %133 : vector<8x1xf32> to vector<8x288xf32>
    %135 = arith.addf %132, %134 : vector<8x288xf32>
    %c0_98 = arith.constant 0 : index
    %c0_99 = arith.constant 0 : index
    %c0_100 = arith.constant 0 : index
    %136 = vector.load %arg13[%c0_98, %c0_99, %c0_100] : memref<2x8x288xf32, #tpu.memory_space<vmem>>, vector<1x8x288xf32>
    %137 = vector.shape_cast %136 : vector<1x8x288xf32> to vector<8x288xf32>
    %138 = vector.shape_cast %135 : vector<8x288xf32> to vector<1x8x288xf32>
    tpu.vector_store %arg13[%c0_98, %c0_99, %c0_100], %138 {strides = array<i32>} : memref<2x8x288xf32, #tpu.memory_space<vmem>>, vector<1x8x288xf32>,
    %139 = vector.broadcast %0 : vector<1x288xf32> to vector<8x288xf32>
    %140 = arith.mulf %135, %139 : vector<8x288xf32>
    %cst_101 = arith.constant dense<0.000000e+00> : vector<8xf32>
    %141 = vector.multi_reduction <add>, %140, %cst_101 [1] : vector<8x288xf32> to vector<8xf32>
    %142 = vector.shape_cast %141 : vector<8xf32> to vector<8x1xf32>
    %cst_102 = arith.constant 0.000000e+00 : f32
    %143 = vector.broadcast %cst_102 : f32 to vector<8x1xf32>
    %144 = arith.addf %143, %142 : vector<8x1xf32>
    %145 = arith.mulf %140, %135 : vector<8x288xf32>
    %cst_103 = arith.constant dense<0.000000e+00> : vector<8xf32>
    %146 = vector.multi_reduction <add>, %145, %cst_103 [1] : vector<8x288xf32> to vector<8xf32>
    %147 = vector.shape_cast %146 : vector<8xf32> to vector<8x1xf32>
    %cst_104 = arith.constant 0.000000e+00 : f32
    %148 = vector.broadcast %cst_104 : f32 to vector<8x1xf32>
    %149 = arith.addf %148, %147 : vector<8x1xf32>
    %c1_105 = arith.constant 1 : index
    %c0_106 = arith.constant 0 : index
    %c0_107 = arith.constant 0 : index
    %150 = vector.load %arg12[%c1_105, %c0_106, %c0_107] : memref<2x8x288xf32, #tpu.memory_space<vmem>>, vector<1x8x288xf32>
    %151 = vector.shape_cast %150 : vector<1x8x288xf32> to vector<8x288xf32>
    %152 = vector.broadcast %93 : vector<8x1xf32> to vector<8x288xf32>
    %153 = arith.mulf %152, %151 : vector<8x288xf32>
    %154 = vector.broadcast %96 : vector<8x1xf32> to vector<8x288xf32>
    %155 = arith.addf %153, %154 : vector<8x288xf32>
    %cst_108 = arith.constant 0.000000e+00 : f32
    %156 = vector.broadcast %cst_108 : f32 to vector<8x288xf32>
    %157 = arith.maximumf %155, %156 : vector<8x288xf32>
    %158 = vector.broadcast %0 : vector<1x288xf32> to vector<8x288xf32>
    %159 = arith.mulf %157, %158 : vector<8x288xf32>
    %c0_109 = arith.constant 0 : index
    %c19_110 = arith.constant 19 : index
    %160 = vector.load %arg14[%c0_109, %c19_110] : memref<8x384xf32, #tpu.memory_space<vmem>>, vector<8x288xf32>
    tpu.vector_store %arg14[%c0_109, %c19_110], %159 {strides = array<i32>} : memref<8x384xf32, #tpu.memory_space<vmem>>, vector<8x288xf32>,
    %c0_111 = arith.constant 0 : index
    %c0_112 = arith.constant 0 : index
    %161 = vector.load %arg14[%c0_111, %c0_112] : memref<8x384xf32, #tpu.memory_space<vmem>>, vector<8x384xf32>
    %162 = vector.extract_strided_slice %161 {offsets = [0, 0], sizes = [8, 288], strides = [1, 1]} : vector<8x384xf32> to vector<8x288xf32>
    %c0_113 = arith.constant 0 : index
    %c0_114 = arith.constant 0 : index
    %163 = vector.load %arg15[%c0_113, %c0_114] : memref<72x288xf32, #tpu.memory_space<vmem>>, vector<8x288xf32>
    tpu.vector_store %arg15[%c0_113, %c0_114], %162 {strides = array<i32>} : memref<72x288xf32, #tpu.memory_space<vmem>>, vector<8x288xf32>,
    %164 = vector.extract_strided_slice %161 {offsets = [0, 1], sizes = [8, 288], strides = [1, 1]} : vector<8x384xf32> to vector<8x288xf32>
    %c8_115 = arith.constant 8 : index
    %c0_116 = arith.constant 0 : index
    %165 = vector.load %arg15[%c8_115, %c0_116] : memref<72x288xf32, #tpu.memory_space<vmem>>, vector<8x288xf32>
    tpu.vector_store %arg15[%c8_115, %c0_116], %164 {strides = array<i32>} : memref<72x288xf32, #tpu.memory_space<vmem>>, vector<8x288xf32>,
    %166 = vector.extract_strided_slice %161 {offsets = [0, 2], sizes = [8, 288], strides = [1, 1]} : vector<8x384xf32> to vector<8x288xf32>
    %c16_117 = arith.constant 16 : index
    %c0_118 = arith.constant 0 : index
    %167 = vector.load %arg15[%c16_117, %c0_118] : memref<72x288xf32, #tpu.memory_space<vmem>>, vector<8x288xf32>
    tpu.vector_store %arg15[%c16_117, %c0_118], %166 {strides = array<i32>} : memref<72x288xf32, #tpu.memory_space<vmem>>, vector<8x288xf32>,
    %168 = vector.extract_strided_slice %161 {offsets = [0, 18], sizes = [8, 288], strides = [1, 1]} : vector<8x384xf32> to vector<8x288xf32>
    %c24_119 = arith.constant 24 : index
    %c0_120 = arith.constant 0 : index
    %169 = vector.load %arg15[%c24_119, %c0_120] : memref<72x288xf32, #tpu.memory_space<vmem>>, vector<8x288xf32>
    tpu.vector_store %arg15[%c24_119, %c0_120], %168 {strides = array<i32>} : memref<72x288xf32, #tpu.memory_space<vmem>>, vector<8x288xf32>,
    %170 = vector.extract_strided_slice %161 {offsets = [0, 19], sizes = [8, 288], strides = [1, 1]} : vector<8x384xf32> to vector<8x288xf32>
    %c32_121 = arith.constant 32 : index
    %c0_122 = arith.constant 0 : index
    %171 = vector.load %arg15[%c32_121, %c0_122] : memref<72x288xf32, #tpu.memory_space<vmem>>, vector<8x288xf32>
    tpu.vector_store %arg15[%c32_121, %c0_122], %170 {strides = array<i32>} : memref<72x288xf32, #tpu.memory_space<vmem>>, vector<8x288xf32>,
    %172 = vector.extract_strided_slice %161 {offsets = [0, 20], sizes = [8, 288], strides = [1, 1]} : vector<8x384xf32> to vector<8x288xf32>
    %c40_123 = arith.constant 40 : index
    %c0_124 = arith.constant 0 : index
    %173 = vector.load %arg15[%c40_123, %c0_124] : memref<72x288xf32, #tpu.memory_space<vmem>>, vector<8x288xf32>
    tpu.vector_store %arg15[%c40_123, %c0_124], %172 {strides = array<i32>} : memref<72x288xf32, #tpu.memory_space<vmem>>, vector<8x288xf32>,
    %174 = vector.extract_strided_slice %161 {offsets = [0, 36], sizes = [8, 288], strides = [1, 1]} : vector<8x384xf32> to vector<8x288xf32>
    %c48_125 = arith.constant 48 : index
    %c0_126 = arith.constant 0 : index
    %175 = vector.load %arg15[%c48_125, %c0_126] : memref<72x288xf32, #tpu.memory_space<vmem>>, vector<8x288xf32>
    tpu.vector_store %arg15[%c48_125, %c0_126], %174 {strides = array<i32>} : memref<72x288xf32, #tpu.memory_space<vmem>>, vector<8x288xf32>,
    %176 = vector.extract_strided_slice %161 {offsets = [0, 37], sizes = [8, 288], strides = [1, 1]} : vector<8x384xf32> to vector<8x288xf32>
    %c56_127 = arith.constant 56 : index
    %c0_128 = arith.constant 0 : index
    %177 = vector.load %arg15[%c56_127, %c0_128] : memref<72x288xf32, #tpu.memory_space<vmem>>, vector<8x288xf32>
    tpu.vector_store %arg15[%c56_127, %c0_128], %176 {strides = array<i32>} : memref<72x288xf32, #tpu.memory_space<vmem>>, vector<8x288xf32>,
    %178 = vector.extract_strided_slice %161 {offsets = [0, 38], sizes = [8, 288], strides = [1, 1]} : vector<8x384xf32> to vector<8x288xf32>
    %c64_129 = arith.constant 64 : index
    %c0_130 = arith.constant 0 : index
    %179 = vector.load %arg15[%c64_129, %c0_130] : memref<72x288xf32, #tpu.memory_space<vmem>>, vector<8x288xf32>
    tpu.vector_store %arg15[%c64_129, %c0_130], %178 {strides = array<i32>} : memref<72x288xf32, #tpu.memory_space<vmem>>, vector<8x288xf32>,
    %c0_131 = arith.constant 0 : index
    %c0_132 = arith.constant 0 : index
    %180 = vector.load %arg15[%c0_131, %c0_132] : memref<72x288xf32, #tpu.memory_space<vmem>>, vector<72x288xf32>
    %181 = arith.truncf %180 : vector<72x288xf32> to vector<72x288xbf16>
    %c0_133 = arith.constant 0 : index
    %c0_134 = arith.constant 0 : index
    %182 = vector.load %arg7[%c0_133, %c0_134] : memref<8x72xbf16, #tpu.memory_space<vmem>>, vector<8x72xbf16>
    %cst_135 = arith.constant dense<0.000000e+00> : vector<8x288xf32>
    %183 = tpu.matmul %182, %181, %cst_135 {dimension_numbers = #tpu.dot_dimension_numbers<[1], [0], [0], [1], [0, 0, 1, 1], [], []>} : vector<8x72xbf16>, vector<72x288xbf16>, vector<8x288xf32> -> vector<8x288xf32>
    %c0_136 = arith.constant 0 : index
    %c0_137 = arith.constant 0 : index
    %184 = vector.load %arg8[%c0_136, %c0_137] : memref<8x1xf32, #tpu.memory_space<vmem>>, vector<8x1xf32>
    %185 = vector.broadcast %184 : vector<8x1xf32> to vector<8x288xf32>
    %186 = arith.addf %183, %185 : vector<8x288xf32>
    %c1_138 = arith.constant 1 : index
    %c0_139 = arith.constant 0 : index
    %c0_140 = arith.constant 0 : index
    %187 = vector.load %arg13[%c1_138, %c0_139, %c0_140] : memref<2x8x288xf32, #tpu.memory_space<vmem>>, vector<1x8x288xf32>
    %188 = vector.shape_cast %187 : vector<1x8x288xf32> to vector<8x288xf32>
    %189 = vector.shape_cast %186 : vector<8x288xf32> to vector<1x8x288xf32>
    tpu.vector_store %arg13[%c1_138, %c0_139, %c0_140], %189 {strides = array<i32>} : memref<2x8x288xf32, #tpu.memory_space<vmem>>, vector<1x8x288xf32>,
    %190 = vector.broadcast %0 : vector<1x288xf32> to vector<8x288xf32>
    %191 = arith.mulf %186, %190 : vector<8x288xf32>
    %cst_141 = arith.constant dense<0.000000e+00> : vector<8xf32>
    %192 = vector.multi_reduction <add>, %191, %cst_141 [1] : vector<8x288xf32> to vector<8xf32>
    %193 = vector.shape_cast %192 : vector<8xf32> to vector<8x1xf32>
    %194 = arith.addf %144, %193 : vector<8x1xf32>
    %195 = arith.mulf %191, %186 : vector<8x288xf32>
    %cst_142 = arith.constant dense<0.000000e+00> : vector<8xf32>
    %196 = vector.multi_reduction <add>, %195, %cst_142 [1] : vector<8x288xf32> to vector<8xf32>
    %197 = vector.shape_cast %196 : vector<8xf32> to vector<8x1xf32>
    %198 = arith.addf %149, %197 : vector<8x1xf32>
    %cst_143 = arith.constant 5.120000e+02 : f32
    %199 = vector.broadcast %cst_143 : f32 to vector<8x1xf32>
    %200 = arith.divf %194, %199 : vector<8x1xf32>
    %cst_144 = arith.constant 5.120000e+02 : f32
    %201 = vector.broadcast %cst_144 : f32 to vector<8x1xf32>
    %202 = arith.divf %198, %201 : vector<8x1xf32>
    %203 = arith.mulf %200, %200 : vector<8x1xf32>
    %204 = arith.subf %202, %203 : vector<8x1xf32>
    %cst_145 = arith.constant 0.000000e+00 : f32
    %205 = vector.broadcast %cst_145 : f32 to vector<8x1xf32>
    %206 = arith.maximumf %204, %205 : vector<8x1xf32>
    %c0_146 = arith.constant 0 : index
    %c0_147 = arith.constant 0 : index
    %207 = vector.load %arg9[%c0_146, %c0_147] : memref<8x1xf32, #tpu.memory_space<vmem>>, vector<8x1xf32>
    %cst_148 = arith.constant 9.99999974E-6 : f32
    %208 = vector.broadcast %cst_148 : f32 to vector<8x1xf32>
    %209 = arith.addf %206, %208 : vector<8x1xf32>
    %210 = math.rsqrt %209 : vector<8x1xf32>
    %211 = arith.mulf %207, %210 : vector<8x1xf32>
    %c0_149 = arith.constant 0 : index
    %c0_150 = arith.constant 0 : index
    %212 = vector.load %arg10[%c0_149, %c0_150] : memref<8x1xf32, #tpu.memory_space<vmem>>, vector<8x1xf32>
    %213 = arith.mulf %200, %211 : vector<8x1xf32>
    %214 = arith.subf %212, %213 : vector<8x1xf32>
    %c0_151 = arith.constant 0 : index
    %c0_152 = arith.constant 0 : index
    %c0_153 = arith.constant 0 : index
    %215 = vector.load %arg13[%c0_151, %c0_152, %c0_153] : memref<2x8x288xf32, #tpu.memory_space<vmem>>, vector<1x8x288xf32>
    %216 = vector.shape_cast %215 : vector<1x8x288xf32> to vector<8x288xf32>
    %217 = vector.broadcast %211 : vector<8x1xf32> to vector<8x288xf32>
    %218 = arith.mulf %217, %216 : vector<8x288xf32>
    %219 = vector.broadcast %214 : vector<8x1xf32> to vector<8x288xf32>
    %220 = arith.addf %218, %219 : vector<8x288xf32>
    %cst_154 = arith.constant 0.000000e+00 : f32
    %221 = vector.broadcast %cst_154 : f32 to vector<8x288xf32>
    %222 = arith.maximumf %220, %221 : vector<8x288xf32>
    %c0_155 = arith.constant 0 : index
    %c0_156 = arith.constant 0 : index
    %c0_157 = arith.constant 0 : index
    %223 = vector.load %arg11[%c0_155, %c0_156, %c0_157] : memref<2x8x288xf32, #tpu.memory_space<vmem>>, vector<1x8x288xf32>
    %224 = vector.shape_cast %223 : vector<1x8x288xf32> to vector<8x288xf32>
    %225 = vector.shape_cast %222 : vector<8x288xf32> to vector<1x8x288xf32>
    tpu.vector_store %arg11[%c0_155, %c0_156, %c0_157], %225 {strides = array<i32>} : memref<2x8x288xf32, #tpu.memory_space<vmem>>, vector<1x8x288xf32>,
    %c1_158 = arith.constant 1 : index
    %c0_159 = arith.constant 0 : index
    %c0_160 = arith.constant 0 : index
    %226 = vector.load %arg13[%c1_158, %c0_159, %c0_160] : memref<2x8x288xf32, #tpu.memory_space<vmem>>, vector<1x8x288xf32>
    %227 = vector.shape_cast %226 : vector<1x8x288xf32> to vector<8x288xf32>
    %228 = vector.broadcast %211 : vector<8x1xf32> to vector<8x288xf32>
    %229 = arith.mulf %228, %227 : vector<8x288xf32>
    %230 = vector.broadcast %214 : vector<8x1xf32> to vector<8x288xf32>
    %231 = arith.addf %229, %230 : vector<8x288xf32>
    %cst_161 = arith.constant 0.000000e+00 : f32
    %232 = vector.broadcast %cst_161 : f32 to vector<8x288xf32>
    %233 = arith.maximumf %231, %232 : vector<8x288xf32>
    %c1_162 = arith.constant 1 : index
    %c0_163 = arith.constant 0 : index
    %c0_164 = arith.constant 0 : index
    %234 = vector.load %arg11[%c1_162, %c0_163, %c0_164] : memref<2x8x288xf32, #tpu.memory_space<vmem>>, vector<1x8x288xf32>
    %235 = vector.shape_cast %234 : vector<1x8x288xf32> to vector<8x288xf32>
    %236 = vector.shape_cast %233 : vector<8x288xf32> to vector<1x8x288xf32>
    tpu.vector_store %arg11[%c1_162, %c0_163, %c0_164], %236 {strides = array<i32>} : memref<2x8x288xf32, #tpu.memory_space<vmem>>, vector<1x8x288xf32>,
    return
  }
  func.func @transform_0(%arg0: i32) -> (i32, i32, i32) {
    %c0_i32 = arith.constant 0 : i32
    %c0_i32_0 = arith.constant 0 : i32
    %c0_i32_1 = arith.constant 0 : i32
    %c0_i32_2 = arith.constant 0 : i32
    return %c0_i32, %c0_i32_0, %c0_i32_1 : i32, i32, i32
  }
  func.func @transform_1(%arg0: i32) -> (i32, i32) {
    %c0_i32 = arith.constant 0 : i32
    %c0_i32_0 = arith.constant 0 : i32
    %c0_i32_1 = arith.constant 0 : i32
    return %c0_i32, %c0_i32_0 : i32, i32
  }
  func.func @transform_2(%arg0: i32) -> (i32, i32) {
    %c0_i32 = arith.constant 0 : i32
    %c0_i32_0 = arith.constant 0 : i32
    %c0_i32_1 = arith.constant 0 : i32
    return %c0_i32, %c0_i32_0 : i32, i32
  }
  func.func @transform_3(%arg0: i32) -> (i32, i32) {
    %c0_i32 = arith.constant 0 : i32
    %c0_i32_0 = arith.constant 0 : i32
    %c0_i32_1 = arith.constant 0 : i32
    return %c0_i32, %c0_i32_0 : i32, i32
  }
  func.func @transform_4(%arg0: i32) -> (i32, i32) {
    %c0_i32 = arith.constant 0 : i32
    %c0_i32_0 = arith.constant 0 : i32
    %c0_i32_1 = arith.constant 0 : i32
    return %c0_i32, %c0_i32_0 : i32, i32
  }
  func.func @transform_5(%arg0: i32) -> (i32, i32) {
    %c0_i32 = arith.constant 0 : i32
    %c0_i32_0 = arith.constant 0 : i32
    %c0_i32_1 = arith.constant 0 : i32
    return %c0_i32, %c0_i32_0 : i32, i32
  }
  func.func @transform_6(%arg0: i32) -> (i32, i32) {
    %c0_i32 = arith.constant 0 : i32
    %c0_i32_0 = arith.constant 0 : i32
    %c0_i32_1 = arith.constant 0 : i32
    return %c0_i32, %c0_i32_0 : i32, i32
  }
  func.func @transform_7(%arg0: i32) -> (i32, i32) {
    %c0_i32 = arith.constant 0 : i32
    %c0_i32_0 = arith.constant 0 : i32
    %c0_i32_1 = arith.constant 0 : i32
    return %c0_i32, %c0_i32_0 : i32, i32
  }
  func.func @transform_8(%arg0: i32) -> (i32, i32) {
    %c0_i32 = arith.constant 0 : i32
    %c0_i32_0 = arith.constant 0 : i32
    %c0_i32_1 = arith.constant 0 : i32
    return %c0_i32, %c0_i32_0 : i32, i32
  }
  func.func @transform_9(%arg0: i32) -> (i32, i32) {
    %c0_i32 = arith.constant 0 : i32
    %c0_i32_0 = arith.constant 0 : i32
    %c0_i32_1 = arith.constant 0 : i32
    return %c0_i32, %c0_i32_0 : i32, i32
  }
  func.func @transform_10(%arg0: i32) -> (i32, i32, i32) {
    %c0_i32 = arith.constant 0 : i32
    %c0_i32_0 = arith.constant 0 : i32
    %c0_i32_1 = arith.constant 0 : i32
    %c0_i32_2 = arith.constant 0 : i32
    return %c0_i32, %c0_i32_0, %c0_i32_1 : i32, i32, i32
  }
}

</mosaic_0001>

<llo_original>
// kernel: conv_two_forward.1
$region0: #{conv_two_forward.1}
  #allocation0 [shape = 'u32[]', space=smem, size = 0x4, offset = 0x4, fixed_abs, tag = 'smem constant byte address 0x4 - core index']
  #allocation1 [shape = 'u32[144,128]{1,0:T(1,128)}', space=vmem, size = 0x12000, scoped, tag = 'internal scratch']
  #allocation2 [shape = 'f32[2,8,288]{2,1,0:T(8,128)}', space=vmem, size = 0x6000, scoped, tag = 'scratch operand']
  #allocation3 [shape = 'f32[2,8,288]{2,1,0:T(8,128)}', space=vmem, size = 0x6000, scoped, tag = 'scratch operand']
  #allocation4 [shape = 'f32[8,384]{1,0:T(8,128)}', space=vmem, size = 0x3000, scoped, tag = 'scratch operand']
  #allocation5 [shape = 'f32[72,288]{1,0:T(8,128)}', space=vmem, size = 0x1b000, scoped, tag = 'scratch operand']
  %s0 = inlined_call_operand.vmem [shape: f32[2,4,384], index: 0, kind: input, shape index: {}]
  %s1 = inlined_call_operand.vmem [shape: f32[1,288], index: 1, kind: input, shape index: {}]
  %s2 = inlined_call_operand.vmem [shape: bf16[8,36], index: 2, kind: input, shape index: {}]
  %s3 = inlined_call_operand.vmem [shape: f32[8,1], index: 3, kind: input, shape index: {}]
  %s4 = inlined_call_operand.vmem [shape: f32[8,1], index: 4, kind: input, shape index: {}]
  %s5 = inlined_call_operand.vmem [shape: f32[8,1], index: 5, kind: input, shape index: {}]
  %s6 = inlined_call_operand.vmem [shape: bf16[8,72], index: 6, kind: input, shape index: {}]
  %s7 = inlined_call_operand.vmem [shape: f32[8,1], index: 7, kind: input, shape index: {}]
  %s8 = inlined_call_operand.vmem [shape: f32[8,1], index: 8, kind: input, shape index: {}]
  %s9 = inlined_call_operand.vmem [shape: f32[8,1], index: 9, kind: input, shape index: {}]
  %s10 = inlined_call_operand.vmem [shape: f32[2,8,288], index: 10, kind: output, shape index: {}]
  %s11 = sld [smem:[#allocation0]]
  $region50: #{conv_two_forward.1} parent=0
    _
  %s13 = ssub.s32 1, %s11
  %s14 = scalar_select 0, %s13, %s11
  // Predicated region
  $region2: #{conv_two_forward.1} parent=0 // pred_check
    _
  $region3: #{conv_two_forward.1} parent=0 // pred_check_branch
    %16 = sbr.rel (0) target = $region5
  $region4: #{conv_two_forward.1} parent=0 // pred_region
    _
  $region5: #{conv_two_forward.1} parent=0 // pred_fallthru
    _
  // Predicated region
  $region6: #{conv_two_forward.1} parent=0 // pred_check
    _
  $region7: #{conv_two_forward.1} parent=0 // pred_check_branch
    %18 = sbr.rel (0) target = $region9
  $region8: #{conv_two_forward.1} parent=0 // pred_region
    _
  $region9: #{conv_two_forward.1} parent=0 // pred_fallthru
    _
  // Predicated region
  $region10: #{conv_two_forward.1} parent=0 // pred_check
    _
  $region11: #{conv_two_forward.1} parent=0 // pred_check_branch
    %20 = sbr.rel (0) target = $region13
  $region12: #{conv_two_forward.1} parent=0 // pred_region
    _
  $region13: #{conv_two_forward.1} parent=0 // pred_fallthru
    _
  // Predicated region
  $region14: #{conv_two_forward.1} parent=0 // pred_check
    _
  $region15: #{conv_two_forward.1} parent=0 // pred_check_branch
    %22 = sbr.rel (0) target = $region17
  $region16: #{conv_two_forward.1} parent=0 // pred_region
    _
  $region17: #{conv_two_forward.1} parent=0 // pred_fallthru
    _
  // Predicated region
  $region18: #{conv_two_forward.1} parent=0 // pred_check
    _
  $region19: #{conv_two_forward.1} parent=0 // pred_check_branch
    %24 = sbr.rel (0) target = $region21
  $region20: #{conv_two_forward.1} parent=0 // pred_region
    _
  $region21: #{conv_two_forward.1} parent=0 // pred_fallthru
    _
  // Predicated region
  $region22: #{conv_two_forward.1} parent=0 // pred_check
    _
  $region23: #{conv_two_forward.1} parent=0 // pred_check_branch
    %26 = sbr.rel (0) target = $region25
  $region24: #{conv_two_forward.1} parent=0 // pred_region
    _
  $region25: #{conv_two_forward.1} parent=0 // pred_fallthru
    _
  // Predicated region
  $region26: #{conv_two_forward.1} parent=0 // pred_check
    _
  $region27: #{conv_two_forward.1} parent=0 // pred_check_branch
    %28 = sbr.rel (0) target = $region29
  $region28: #{conv_two_forward.1} parent=0 // pred_region
    _
  $region29: #{conv_two_forward.1} parent=0 // pred_fallthru
    _
  // Predicated region
  $region30: #{conv_two_forward.1} parent=0 // pred_check
    _
  $region31: #{conv_two_forward.1} parent=0 // pred_check_branch
    %30 = sbr.rel (0) target = $region33
  $region32: #{conv_two_forward.1} parent=0 // pred_region
    _
  $region33: #{conv_two_forward.1} parent=0 // pred_fallthru
    _
  // Predicated region
  $region34: #{conv_two_forward.1} parent=0 // pred_check
    _
  $region35: #{conv_two_forward.1} parent=0 // pred_check_branch
    %32 = sbr.rel (0) target = $region37
  $region36: #{conv_two_forward.1} parent=0 // pred_region
    _
  $region37: #{conv_two_forward.1} parent=0 // pred_fallthru
    _
  // Predicated region
  $region38: #{conv_two_forward.1} parent=0 // pred_check
    _
  $region39: #{conv_two_forward.1} parent=0 // pred_check_branch
    %34 = sbr.rel (0) target = $region41
  $region40: #{conv_two_forward.1} parent=0 // pred_region
    _
  $region41: #{conv_two_forward.1} parent=0 // pred_fallthru
    _
  %v36 = vld [vmem:[%s1] sm:$0x7]
  %v37 = vld [vmem:[%s0] sm:$0xff]
  %v38 = vld [vmem:[%s0 + $0x8] sm:$0xf]
  %v41 = vcombine.high %v37, %v37
  %43 = vst [vmem:[#allocation5] sm:$0xf] %v37
  %44 = vst [vmem:[#allocation5 + $0x8] sm:$0xf] %v41
  %vm45 = vcmask 257024
  %46 = vst.msk [vmem:[#allocation5 + $0x10] sm:$0xf] %vm45, %v38
  %v47 = vcombine.low %v37, %v37
  %v48 = vcombine.low %v38, %v38
  %49 = vrot.lane.b32.xlu0 %v47, 127
  %v50 = vpop.permute.xlu0 %49
  %51 = vrot.lane.b32.xlu0 %v37, 127
  %v52 = vpop.permute.xlu0 %51
  %53 = vrot.lane.b32.xlu0 %v48, 127
  %v54 = vpop.permute.xlu0 %53
  %vm55 = vcmask 1039360
  %v56 = vsel %vm55, %v50, %v52
  %v57 = vsel %vm55, %v52, %v54
  %61 = vst [vmem:[#allocation5] sm:$0xf0] %v56
  %62 = vst [vmem:[#allocation5 + $0x8] sm:$0xf0] %v57
  %vm63 = vcmask 261124
  %64 = vst.msk [vmem:[#allocation5 + $0x10] sm:$0xf0] %vm63, %v54
  %65 = vrot.lane.b32.xlu0 %v37, 126
  %v66 = vpop.permute.xlu0 %65
  %67 = vrot.lane.b32.xlu0 %v41, 126
  %v68 = vpop.permute.xlu0 %67
  %69 = vrot.lane.b32.xlu0 %v38, 126
  %v70 = vpop.permute.xlu0 %69
  %vm71 = vcmask 1031168
  %v72 = vsel %vm71, %v66, %v68
  %v73 = vsel %vm71, %v68, %v70
  %77 = vst [vmem:[#allocation5 + $0x18] sm:$0xf] %v72
  %78 = vst [vmem:[#allocation5 + $0x20] sm:$0xf] %v73
  %79 = vst.msk [vmem:[#allocation5 + $0x28] sm:$0xf] %vm45, %v70
  %80 = vrot.lane.b32.xlu0 %v47, 110
  %v81 = vpop.permute.xlu0 %80
  %82 = vrot.lane.b32.xlu0 %v37, 110
  %v83 = vpop.permute.xlu0 %82
  %84 = vrot.lane.b32.xlu0 %v48, 110
  %v85 = vpop.permute.xlu0 %84
  %vm86 = vcmask 900096
  %v87 = vsel %vm86, %v81, %v83
  %v88 = vsel %vm86, %v83, %v85
  %92 = vst [vmem:[#allocation5 + $0x18] sm:$0xf0] %v87
  %93 = vst [vmem:[#allocation5 + $0x20] sm:$0xf0] %v88
  %94 = vst.msk [vmem:[#allocation5 + $0x28] sm:$0xf0] %vm63, %v85
  %95 = vrot.lane.b32.xlu0 %v37, 109
  %v96 = vpop.permute.xlu0 %95
  %97 = vrot.lane.b32.xlu0 %v41, 109
  %v98 = vpop.permute.xlu0 %97
  %99 = vrot.lane.b32.xlu0 %v38, 109
  %v100 = vpop.permute.xlu0 %99
  %vm101 = vcmask 891904
  %v102 = vsel %vm101, %v96, %v98
  %v103 = vsel %vm101, %v98, %v100
  %107 = vst [vmem:[#allocation5 + $0x30] sm:$0xf] %v102
  %108 = vst [vmem:[#allocation5 + $0x38] sm:$0xf] %v103
  %109 = vst.msk [vmem:[#allocation5 + $0x40] sm:$0xf] %vm45, %v100
  %110 = vrot.lane.b32.xlu0 %v47, 108
  %v111 = vpop.permute.xlu0 %110
  %112 = vrot.lane.b32.xlu0 %v37, 108
  %v113 = vpop.permute.xlu0 %112
  %114 = vrot.lane.b32.xlu0 %v48, 108
  %v115 = vpop.permute.xlu0 %114
  %vm116 = vcmask 883712
  %v117 = vsel %vm116, %v111, %v113
  %v118 = vsel %vm116, %v113, %v115
  %122 = vst [vmem:[#allocation5 + $0x30] sm:$0xf0] %v117
  %123 = vst [vmem:[#allocation5 + $0x38] sm:$0xf0] %v118
  %124 = vst.msk [vmem:[#allocation5 + $0x40] sm:$0xf0] %vm63, %v115
  %125 = vrot.lane.b32.xlu0 %v37, 92
  %v126 = vpop.permute.xlu0 %125
  %127 = vrot.lane.b32.xlu0 %v41, 92
  %v128 = vpop.permute.xlu0 %127
  %129 = vrot.lane.b32.xlu0 %v38, 92
  %v130 = vpop.permute.xlu0 %129
  %vm131 = vcmask 752640
  %v132 = vsel %vm131, %v126, %v128
  %v133 = vsel %vm131, %v128, %v130
  %137 = vst [vmem:[#allocation5 + $0x48] sm:$0xf] %v132
  %138 = vst [vmem:[#allocation5 + $0x50] sm:$0xf] %v133
  %139 = vst.msk [vmem:[#allocation5 + $0x58] sm:$0xf] %vm45, %v130
  %140 = vrot.lane.b32.xlu0 %v47, 91
  %v141 = vpop.permute.xlu0 %140
  %142 = vrot.lane.b32.xlu0 %v37, 91
  %v143 = vpop.permute.xlu0 %142
  %144 = vrot.lane.b32.xlu0 %v48, 91
  %v145 = vpop.permute.xlu0 %144
  %vm146 = vcmask 744448
  %v147 = vsel %vm146, %v141, %v143
  %v148 = vsel %vm146, %v143, %v145
  %152 = vst [vmem:[#allocation5 + $0x48] sm:$0xf0] %v147
  %153 = vst [vmem:[#allocation5 + $0x50] sm:$0xf0] %v148
  %154 = vst.msk [vmem:[#allocation5 + $0x58] sm:$0xf0] %vm63, %v145
  %155 = vrot.lane.b32.xlu0 %v37, 90
  %v156 = vpop.permute.xlu0 %155
  %157 = vrot.lane.b32.xlu0 %v41, 90
  %v158 = vpop.permute.xlu0 %157
  %159 = vrot.lane.b32.xlu0 %v38, 90
  %v160 = vpop.permute.xlu0 %159
  %vm161 = vcmask 736256
  %v162 = vsel %vm161, %v156, %v158
  %v163 = vsel %vm161, %v158, %v160
  %167 = vst [vmem:[#allocation5 + $0x60] sm:$0xf] %v162
  %168 = vst [vmem:[#allocation5 + $0x68] sm:$0xf] %v163
  %169 = vst.msk [vmem:[#allocation5 + $0x70] sm:$0xf] %vm45, %v160
  %v170 = vld [vmem:[#allocation5] sm:$0xff]
  %v171 = vld [vmem:[#allocation5 + $0x8] sm:$0xff]
  %v172 = vld [vmem:[#allocation5 + $0x10] sm:$0xff]
  %v173 = vld [vmem:[#allocation5 + $0x18] sm:$0xff]
  %v174 = vld [vmem:[#allocation5 + $0x20] sm:$0xff]
  %v175 = vld [vmem:[#allocation5 + $0x28] sm:$0xff]
  %v176 = vld [vmem:[#allocation5 + $0x30] sm:$0xff]
  %v177 = vld [vmem:[#allocation5 + $0x38] sm:$0xff]
  %v178 = vld [vmem:[#allocation5 + $0x40] sm:$0xff]
  %v179 = vld [vmem:[#allocation5 + $0x48] sm:$0xff]
  %v180 = vld [vmem:[#allocation5 + $0x50] sm:$0xff]
  %v181 = vld [vmem:[#allocation5 + $0x58] sm:$0xff]
  %v182 = vld [vmem:[#allocation5 + $0x60] sm:$0xf]
  %v183 = vld [vmem:[#allocation5 + $0x68] sm:$0xf]
  %v184 = vld [vmem:[#allocation5 + $0x70] sm:$0xf]
  %v185 = vpack.c.bf16 %v173, %v170
  %v186 = vpack.c.bf16 %v174, %v171
  %v187 = vpack.c.bf16 %v175, %v172
  %v188 = vpack.c.bf16 %v179, %v176
  %v189 = vpack.c.bf16 %v180, %v177
  %v190 = vpack.c.bf16 %v181, %v178
  %v191 = vpack.c.bf16 %v182, %v182
  %v192 = vpack.c.bf16 %v183, %v183
  %v193 = vpack.c.bf16 %v184, %v184
  %v194 = vld [vmem:[%s2] sm:$0xf]
  %v195 = vld [vmem:[%s3] sm:$0xff]
  %197 = vset.pattern.permute.xlu0 0
  %198 = vperm.xlu0 %197, %v195
  %v199 = vpop.permute.xlu0 %198
  %vm201 = vcmask 293888
  %v203 = vsel %vm201, %v194, 0
  %vm205 = vcmask 1041408
  %v207 = vsel %vm205, %v191, 0
  %v210 = vsel %vm205, %v192, 0
  %v213 = vsel %vm205, %v193, 0
  %215 = vmatprep.subr.bf16.mxu0 %v186
  %216 = vmatpush1.bf16.msra.mxu0 %v185
  %217 = vmatprep.subr.bf16.mxu0 %v189
  %218 = vmatpush1.bf16.msra.mxu0 %v188
  %219 = vmatprep.subr.bf16.mxu0 %v210
  %220 = vmatpush1.bf16.msra.mxu0 %v207
  %221 = vmatprep.subr.bf16.mxu0 0
  %222 = vmatpush1.bf16.msra.mxu0 0
  %223 = vmatprep.subr.bf16.mxu0 0
  %224 = vmatpush1.bf16.msra.mxu0 0
  %225 = vmatprep.subr.bf16.mxu0 0
  %226 = vmatpush1.bf16.msra.mxu0 0
  %227 = vmatprep.subr.bf16.mxu0 0
  %228 = vmatpush1.bf16.msra.mxu0 0
  %229 = vmatprep.subr.bf16.mxu0 0
  %230 = vmatpush1.bf16.msra.mxu0 0
  %231 = vmatprep.subr.bf16.mxu0 0
  %232 = vmatpush1.bf16.msra.mxu0 0
  %233 = vmatprep.subr.bf16.mxu0 0
  %234 = vmatpush1.bf16.msra.mxu0 0
  %235 = vmatprep.subr.bf16.mxu0 0
  %236 = vmatpush1.bf16.msra.mxu0 0
  %237 = vmatprep.subr.bf16.mxu0 0
  %238 = vmatpush1.bf16.msra.mxu0 0
  %239 = vmatprep.subr.bf16.mxu0 0
  %240 = vmatpush1.bf16.msra.mxu0 0
  %241 = vmatprep.subr.bf16.mxu0 0
  %242 = vmatpush1.bf16.msra.mxu0 0
  %243 = vmatprep.subr.bf16.mxu0 0
  %244 = vmatpush1.bf16.msra.mxu0 0
  %245 = vmatprep.subr.bf16.mxu0 0
  %246 = vmatpush1.bf16.msra.mxu0 0
  %247 = vmatprep.mubr.bf16.mxu0 0
  %248 = vmatmul.mubr.bf16.gmra.mrb[0].mxu0 %v203
  %v249 = vpop.f32.mrb[0].mxu0
  %v250 = vadd.f32 %v199, %v249
  %v251 = vpop.f32.mrb[0].mxu0
  %v252 = vadd.f32 %v199, %v251
  %v253 = vpop.f32.mrb[0].mxu0
  %v254 = vpop.f32.mrb[0].mxu0
  %255 = vdwg.mxu0
  %256 = vmatprep.subr.bf16.mxu0 0
  %257 = vmatpush1.bf16.msra.mxu0 %v187
  %258 = vmatprep.subr.bf16.mxu0 0
  %259 = vmatpush1.bf16.msra.mxu0 %v190
  %260 = vmatprep.subr.bf16.mxu0 0
  %261 = vmatpush1.bf16.msra.mxu0 %v213
  %262 = vmatprep.subr.bf16.mxu0 0
  %263 = vmatpush1.bf16.msra.mxu0 0
  %264 = vmatprep.subr.bf16.mxu0 0
  %265 = vmatpush1.bf16.msra.mxu0 0
  %266 = vmatprep.subr.bf16.mxu0 0
  %267 = vmatpush1.bf16.msra.mxu0 0
  %268 = vmatprep.subr.bf16.mxu0 0
  %269 = vmatpush1.bf16.msra.mxu0 0
  %270 = vmatprep.subr.bf16.mxu0 0
  %271 = vmatpush1.bf16.msra.mxu0 0
  %272 = vmatprep.subr.bf16.mxu0 0
  %273 = vmatpush1.bf16.msra.mxu0 0
  %274 = vmatprep.subr.bf16.mxu0 0
  %275 = vmatpush1.bf16.msra.mxu0 0
  %276 = vmatprep.subr.bf16.mxu0 0
  %277 = vmatpush1.bf16.msra.mxu0 0
  %278 = vmatprep.subr.bf16.mxu0 0
  %279 = vmatpush1.bf16.msra.mxu0 0
  %280 = vmatprep.subr.bf16.mxu0 0
  %281 = vmatpush1.bf16.msra.mxu0 0
  %282 = vmatprep.subr.bf16.mxu0 0
  %283 = vmatpush1.bf16.msra.mxu0 0
  %284 = vmatprep.subr.bf16.mxu0 0
  %285 = vmatpush1.bf16.msra.mxu0 0
  %286 = vmatprep.subr.bf16.mxu0 0
  %287 = vmatpush1.bf16.msra.mxu0 0
  %288 = vmatprep.mubr.bf16.mxu0 0
  %289 = vmatmul.mubr.bf16.gmra.mrb[0].mxu0 %v203
  %v290 = vpop.f32.mrb[0].mxu0
  %v291 = vadd.f32 %v199, %v290
  %v292 = vpop.f32.mrb[0].mxu0
  %v293 = vpop.f32.mrb[0].mxu0
  %v294 = vpop.f32.mrb[0].mxu0
  %295 = vdwg.mxu0
  %296 = vst [vmem:[#allocation2] sm:$0xff] %v250
  %297 = vst [vmem:[#allocation2 + $0x8] sm:$0xff] %v252
  %vm298 = vcmask 261120
  %299 = vst.msk [vmem:[#allocation2 + $0x10] sm:$0xff] %vm298, %v291
  %v301 = vlaneseq
  %v302 = vshrl.u32 %v301, 7
  %v303 = vsub.s32 0, %v302
  %v304 = vrot.slane %v36, %v303
  %v305 = vlaneseq
  %v306 = vshrl.u32 %v305, 7
  %v307 = vsub.s32 1, %v306
  %v308 = vrot.slane %v36, %v307
  %v309 = vlaneseq
  %v310 = vshrl.u32 %v309, 7
  %v311 = vsub.s32 2, %v310
  %v312 = vrot.slane %v36, %v311
  %v316 = vmul.f32 %v250, %v304
  %v317 = vmul.f32 %v252, %v308
  %v318 = vmul.f32 %v291, %v312
  %v319 = vadd.f32 %v316, %v317
  %v320 = vsel %vm298, %v318, 0.0
  %v321 = vadd.f32 %v319, %v320
  %322 = vadd.xlane.f32.xlu0 %v321
  %v323 = vpop.xlane.xlu0 %322
  %v324 = vadd.f32 %v323, 0.0
  %v325 = vmul.f32 %v316, %v250
  %v326 = vmul.f32 %v317, %v252
  %v327 = vmul.f32 %v318, %v291
  %v328 = vadd.f32 %v325, %v326
  %v329 = vsel %vm298, %v327, 0.0
  %v330 = vadd.f32 %v328, %v329
  %331 = vadd.xlane.f32.xlu0 %v330
  %v332 = vpop.xlane.xlu0 %331
  %v333 = vadd.f32 %v332, 0.0
  %s334 = scalar_lea.vmem %s0, 12
  %v335 = vld [vmem:[%s334] sm:$0xff]
  %v336 = vld [vmem:[%s334 + $0x8] sm:$0xf]
  %v339 = vcombine.high %v335, %v335
  %341 = vst [vmem:[#allocation5] sm:$0xf] %v335
  %342 = vst [vmem:[#allocation5 + $0x8] sm:$0xf] %v339
  %343 = vst.msk [vmem:[#allocation5 + $0x10] sm:$0xf] %vm45, %v336
  %v344 = vcombine.low %v335, %v335
  %v345 = vcombine.low %v336, %v336
  %346 = vrot.lane.b32.xlu0 %v344, 127
  %v347 = vpop.permute.xlu0 %346
  %348 = vrot.lane.b32.xlu0 %v335, 127
  %v349 = vpop.permute.xlu0 %348
  %350 = vrot.lane.b32.xlu0 %v345, 127
  %v351 = vpop.permute.xlu0 %350
  %v352 = vsel %vm55, %v347, %v349
  %v353 = vsel %vm55, %v349, %v351
  %357 = vst [vmem:[#allocation5] sm:$0xf0] %v352
  %358 = vst [vmem:[#allocation5 + $0x8] sm:$0xf0] %v353
  %359 = vst.msk [vmem:[#allocation5 + $0x10] sm:$0xf0] %vm63, %v351
  %360 = vrot.lane.b32.xlu0 %v335, 126
  %v361 = vpop.permute.xlu0 %360
  %362 = vrot.lane.b32.xlu0 %v339, 126
  %v363 = vpop.permute.xlu0 %362
  %364 = vrot.lane.b32.xlu0 %v336, 126
  %v365 = vpop.permute.xlu0 %364
  %v366 = vsel %vm71, %v361, %v363
  %v367 = vsel %vm71, %v363, %v365
  %371 = vst [vmem:[#allocation5 + $0x18] sm:$0xf] %v366
  %372 = vst [vmem:[#allocation5 + $0x20] sm:$0xf] %v367
  %373 = vst.msk [vmem:[#allocation5 + $0x28] sm:$0xf] %vm45, %v365
  %374 = vrot.lane.b32.xlu0 %v344, 110
  %v375 = vpop.permute.xlu0 %374
  %376 = vrot.lane.b32.xlu0 %v335, 110
  %v377 = vpop.permute.xlu0 %376
  %378 = vrot.lane.b32.xlu0 %v345, 110
  %v379 = vpop.permute.xlu0 %378
  %v380 = vsel %vm86, %v375, %v377
  %v381 = vsel %vm86, %v377, %v379
  %385 = vst [vmem:[#allocation5 + $0x18] sm:$0xf0] %v380
  %386 = vst [vmem:[#allocation5 + $0x20] sm:$0xf0] %v381
  %387 = vst.msk [vmem:[#allocation5 + $0x28] sm:$0xf0] %vm63, %v379
  %388 = vrot.lane.b32.xlu0 %v335, 109
  %v389 = vpop.permute.xlu0 %388
  %390 = vrot.lane.b32.xlu0 %v339, 109
  %v391 = vpop.permute.xlu0 %390
  %392 = vrot.lane.b32.xlu0 %v336, 109
  %v393 = vpop.permute.xlu0 %392
  %v394 = vsel %vm101, %v389, %v391
  %v395 = vsel %vm101, %v391, %v393
  %399 = vst [vmem:[#allocation5 + $0x30] sm:$0xf] %v394
  %400 = vst [vmem:[#allocation5 + $0x38] sm:$0xf] %v395
  %401 = vst.msk [vmem:[#allocation5 + $0x40] sm:$0xf] %vm45, %v393
  %402 = vrot.lane.b32.xlu0 %v344, 108
  %v403 = vpop.permute.xlu0 %402
  %404 = vrot.lane.b32.xlu0 %v335, 108
  %v405 = vpop.permute.xlu0 %404
  %406 = vrot.lane.b32.xlu0 %v345, 108
  %v407 = vpop.permute.xlu0 %406
  %v408 = vsel %vm116, %v403, %v405
  %v409 = vsel %vm116, %v405, %v407
  %413 = vst [vmem:[#allocation5 + $0x30] sm:$0xf0] %v408
  %414 = vst [vmem:[#allocation5 + $0x38] sm:$0xf0] %v409
  %415 = vst.msk [vmem:[#allocation5 + $0x40] sm:$0xf0] %vm63, %v407
  %416 = vrot.lane.b32.xlu0 %v335, 92
  %v417 = vpop.permute.xlu0 %416
  %418 = vrot.lane.b32.xlu0 %v339, 92
  %v419 = vpop.permute.xlu0 %418
  %420 = vrot.lane.b32.xlu0 %v336, 92
  %v421 = vpop.permute.xlu0 %420
  %v422 = vsel %vm131, %v417, %v419
  %v423 = vsel %vm131, %v419, %v421
  %427 = vst [vmem:[#allocation5 + $0x48] sm:$0xf] %v422
  %428 = vst [vmem:[#allocation5 + $0x50] sm:$0xf] %v423
  %429 = vst.msk [vmem:[#allocation5 + $0x58] sm:$0xf] %vm45, %v421
  %430 = vrot.lane.b32.xlu0 %v344, 91
  %v431 = vpop.permute.xlu0 %430
  %432 = vrot.lane.b32.xlu0 %v335, 91
  %v433 = vpop.permute.xlu0 %432
  %434 = vrot.lane.b32.xlu0 %v345, 91
  %v435 = vpop.permute.xlu0 %434
  %v436 = vsel %vm146, %v431, %v433
  %v437 = vsel %vm146, %v433, %v435
  %441 = vst [vmem:[#allocation5 + $0x48] sm:$0xf0] %v436
  %442 = vst [vmem:[#allocation5 + $0x50] sm:$0xf0] %v437
  %443 = vst.msk [vmem:[#allocation5 + $0x58] sm:$0xf0] %vm63, %v435
  %444 = vrot.lane.b32.xlu0 %v335, 90
  %v445 = vpop.permute.xlu0 %444
  %446 = vrot.lane.b32.xlu0 %v339, 90
  %v447 = vpop.permute.xlu0 %446
  %448 = vrot.lane.b32.xlu0 %v336, 90
  %v449 = vpop.permute.xlu0 %448
  %v450 = vsel %vm161, %v445, %v447
  %v451 = vsel %vm161, %v447, %v449
  %455 = vst [vmem:[#allocation5 + $0x60] sm:$0xf] %v450
  %456 = vst [vmem:[#allocation5 + $0x68] sm:$0xf] %v451
  %457 = vst.msk [vmem:[#allocation5 + $0x70] sm:$0xf] %vm45, %v449
  %v458 = vld [vmem:[#allocation5] sm:$0xff]
  %v459 = vld [vmem:[#allocation5 + $0x8] sm:$0xff]
  %v460 = vld [vmem:[#allocation5 + $0x10] sm:$0xff]
  %v461 = vld [vmem:[#allocation5 + $0x18] sm:$0xff]
  %v462 = vld [vmem:[#allocation5 + $0x20] sm:$0xff]
  %v463 = vld [vmem:[#allocation5 + $0x28] sm:$0xff]
  %v464 = vld [vmem:[#allocation5 + $0x30] sm:$0xff]
  %v465 = vld [vmem:[#allocation5 + $0x38] sm:$0xff]
  %v466 = vld [vmem:[#allocation5 + $0x40] sm:$0xff]
  %v467 = vld [vmem:[#allocation5 + $0x48] sm:$0xff]
  %v468 = vld [vmem:[#allocation5 + $0x50] sm:$0xff]
  %v469 = vld [vmem:[#allocation5 + $0x58] sm:$0xff]
  %v470 = vld [vmem:[#allocation5 + $0x60] sm:$0xf]
  %v471 = vld [vmem:[#allocation5 + $0x68] sm:$0xf]
  %v472 = vld [vmem:[#allocation5 + $0x70] sm:$0xf]
  %v473 = vpack.c.bf16 %v461, %v458
  %v474 = vpack.c.bf16 %v462, %v459
  %v475 = vpack.c.bf16 %v463, %v460
  %v476 = vpack.c.bf16 %v467, %v464
  %v477 = vpack.c.bf16 %v468, %v465
  %v478 = vpack.c.bf16 %v469, %v466
  %v479 = vpack.c.bf16 %v470, %v470
  %v480 = vpack.c.bf16 %v471, %v471
  %v481 = vpack.c.bf16 %v472, %v472
  %v482 = vld [vmem:[%s2] sm:$0xf]
  %v483 = vld [vmem:[%s3] sm:$0xff]
  %485 = vset.pattern.permute.xlu0 0
  %486 = vperm.xlu0 %485, %v483
  %v487 = vpop.permute.xlu0 %486
  %v490 = vsel %vm201, %v482, 0
  %v493 = vsel %vm205, %v479, 0
  %v496 = vsel %vm205, %v480, 0
  %v499 = vsel %vm205, %v481, 0
  %501 = vmatprep.subr.bf16.mxu0 %v474
  %502 = vmatpush1.bf16.msra.mxu0 %v473
  %503 = vmatprep.subr.bf16.mxu0 %v477
  %504 = vmatpush1.bf16.msra.mxu0 %v476
  %505 = vmatprep.subr.bf16.mxu0 %v496
  %506 = vmatpush1.bf16.msra.mxu0 %v493
  %507 = vmatprep.subr.bf16.mxu0 0
  %508 = vmatpush1.bf16.msra.mxu0 0
  %509 = vmatprep.subr.bf16.mxu0 0
  %510 = vmatpush1.bf16.msra.mxu0 0
  %511 = vmatprep.subr.bf16.mxu0 0
  %512 = vmatpush1.bf16.msra.mxu0 0
  %513 = vmatprep.subr.bf16.mxu0 0
  %514 = vmatpush1.bf16.msra.mxu0 0
  %515 = vmatprep.subr.bf16.mxu0 0
  %516 = vmatpush1.bf16.msra.mxu0 0
  %517 = vmatprep.subr.bf16.mxu0 0
  %518 = vmatpush1.bf16.msra.mxu0 0
  %519 = vmatprep.subr.bf16.mxu0 0
  %520 = vmatpush1.bf16.msra.mxu0 0
  %521 = vmatprep.subr.bf16.mxu0 0
  %522 = vmatpush1.bf16.msra.mxu0 0
  %523 = vmatprep.subr.bf16.mxu0 0
  %524 = vmatpush1.bf16.msra.mxu0 0
  %525 = vmatprep.subr.bf16.mxu0 0
  %526 = vmatpush1.bf16.msra.mxu0 0
  %527 = vmatprep.subr.bf16.mxu0 0
  %528 = vmatpush1.bf16.msra.mxu0 0
  %529 = vmatprep.subr.bf16.mxu0 0
  %530 = vmatpush1.bf16.msra.mxu0 0
  %531 = vmatprep.subr.bf16.mxu0 0
  %532 = vmatpush1.bf16.msra.mxu0 0
  %533 = vmatprep.mubr.bf16.mxu0 0
  %534 = vmatmul.mubr.bf16.gmra.mrb[0].mxu0 %v490
  %v535 = vpop.f32.mrb[0].mxu0
  %v536 = vadd.f32 %v487, %v535
  %v537 = vpop.f32.mrb[0].mxu0
  %v538 = vadd.f32 %v487, %v537
  %v539 = vpop.f32.mrb[0].mxu0
  %v540 = vpop.f32.mrb[0].mxu0
  %541 = vdwg.mxu0
  %542 = vmatprep.subr.bf16.mxu0 0
  %543 = vmatpush1.bf16.msra.mxu0 %v475
  %544 = vmatprep.subr.bf16.mxu0 0
  %545 = vmatpush1.bf16.msra.mxu0 %v478
  %546 = vmatprep.subr.bf16.mxu0 0
  %547 = vmatpush1.bf16.msra.mxu0 %v499
  %548 = vmatprep.subr.bf16.mxu0 0
  %549 = vmatpush1.bf16.msra.mxu0 0
  %550 = vmatprep.subr.bf16.mxu0 0
  %551 = vmatpush1.bf16.msra.mxu0 0
  %552 = vmatprep.subr.bf16.mxu0 0
  %553 = vmatpush1.bf16.msra.mxu0 0
  %554 = vmatprep.subr.bf16.mxu0 0
  %555 = vmatpush1.bf16.msra.mxu0 0
  %556 = vmatprep.subr.bf16.mxu0 0
  %557 = vmatpush1.bf16.msra.mxu0 0
  %558 = vmatprep.subr.bf16.mxu0 0
  %559 = vmatpush1.bf16.msra.mxu0 0
  %560 = vmatprep.subr.bf16.mxu0 0
  %561 = vmatpush1.bf16.msra.mxu0 0
  %562 = vmatprep.subr.bf16.mxu0 0
  %563 = vmatpush1.bf16.msra.mxu0 0
  %564 = vmatprep.subr.bf16.mxu0 0
  %565 = vmatpush1.bf16.msra.mxu0 0
  %566 = vmatprep.subr.bf16.mxu0 0
  %567 = vmatpush1.bf16.msra.mxu0 0
  %568 = vmatprep.subr.bf16.mxu0 0
  %569 = vmatpush1.bf16.msra.mxu0 0
  %570 = vmatprep.subr.bf16.mxu0 0
  %571 = vmatpush1.bf16.msra.mxu0 0
  %572 = vmatprep.subr.bf16.mxu0 0
  %573 = vmatpush1.bf16.msra.mxu0 0
  %574 = vmatprep.mubr.bf16.mxu0 0
  %575 = vmatmul.mubr.bf16.gmra.mrb[0].mxu0 %v490
  %v576 = vpop.f32.mrb[0].mxu0
  %v577 = vadd.f32 %v487, %v576
  %v578 = vpop.f32.mrb[0].mxu0
  %v579 = vpop.f32.mrb[0].mxu0
  %v580 = vpop.f32.mrb[0].mxu0
  %581 = vdwg.mxu0
  %s582 = scalar_lea.vmem [#allocation2], 24
  %583 = vst [vmem:[%s582] sm:$0xff] %v536
  %584 = vst [vmem:[%s582 + $0x8] sm:$0xff] %v538
  %585 = vst.msk [vmem:[%s582 + $0x10] sm:$0xff] %vm298, %v577
  %v586 = vmul.f32 %v536, %v304
  %v587 = vmul.f32 %v538, %v308
  %v588 = vmul.f32 %v577, %v312
  %v589 = vadd.f32 %v586, %v587
  %v590 = vsel %vm298, %v588, 0.0
  %v591 = vadd.f32 %v589, %v590
  %592 = vadd.xlane.f32.xlu0 %v591
  %v593 = vpop.xlane.xlu0 %592
  %v594 = vadd.f32 %v324, %v593
  %v595 = vmul.f32 %v586, %v536
  %v596 = vmul.f32 %v587, %v538
  %v597 = vmul.f32 %v588, %v577
  %v598 = vadd.f32 %v595, %v596
  %v599 = vsel %vm298, %v597, 0.0
  %v600 = vadd.f32 %v598, %v599
  %601 = vadd.xlane.f32.xlu0 %v600
  %v602 = vpop.xlane.xlu0 %601
  %v603 = vadd.f32 %v333, %v602
  %v604 = vrcp.pop 512.0
  %v605 = vmul.f32 %v594, %v604
  %v606 = vmul.f32 %v603, %v604
  %v607 = vmul.f32 %v605, %v605
  %v608 = vsub.f32 %v606, %v607
  %v609 = vmax.f32 %v608, 0.0
  %v610 = vld [vmem:[%s4] sm:$0xff]
  %v611 = vadd.f32 %v609, 1e-05
  %v612 = vrsqrt.pop %v611
  %v613 = vmul.f32 %v610, %v612
  %v614 = vld [vmem:[%s5] sm:$0xff]
  %v615 = vmul.f32 %v605, %v613
  %v616 = vsub.f32 %v614, %v615
  %617 = vst [vmem:[#allocation4] sm:$0xff] 0.0
  %618 = vst [vmem:[#allocation4 + $0x8] sm:$0xff] 0.0
  %619 = vst [vmem:[#allocation4 + $0x10] sm:$0xff] 0.0
  %v620 = vld [vmem:[#allocation2] sm:$0xff]
  %v621 = vld [vmem:[#allocation2 + $0x8] sm:$0xff]
  %v622 = vld [vmem:[#allocation2 + $0x10] sm:$0xff]
  %624 = vset.pattern.permute.xlu0 0
  %625 = vperm.xlu0 %624, %v613
  %v626 = vpop.permute.xlu0 %625
  %v628 = vmul.f32 %v626, %v620
  %v629 = vmul.f32 %v626, %v621
  %v630 = vmul.f32 %v626, %v622
  %632 = vset.pattern.permute.xlu0 0
  %633 = vperm.xlu0 %632, %v616
  %v634 = vpop.permute.xlu0 %633
  %v636 = vadd.f32 %v628, %v634
  %v637 = vadd.f32 %v629, %v634
  %v638 = vadd.f32 %v630, %v634
  %v639 = vmax.f32 %v636, 0.0
  %v640 = vmax.f32 %v637, 0.0
  %v641 = vmax.f32 %v638, 0.0
  %v642 = vmul.f32 %v639, %v304
  %v643 = vmul.f32 %v640, %v308
  %v644 = vmul.f32 %v641, %v312
  %648 = vrot.lane.b32.xlu0 %v642, 19
  %v649 = vpop.permute.xlu0 %648
  %650 = vrot.lane.b32.xlu0 %v643, 19
  %v651 = vpop.permute.xlu0 %650
  %652 = vrot.lane.b32.xlu0 %v644, 19
  %v653 = vpop.permute.xlu0 %652
  %vm654 = vcmask 154624
  %v655 = vsel %vm654, %v649, %v651
  %v656 = vsel %vm654, %v651, %v653
  %vm660 = vcmask 1047704
  %661 = vst.msk [vmem:[#allocation4] sm:$0xff] %vm660, %v649
  %662 = vst [vmem:[#allocation4 + $0x8] sm:$0xff] %v655
  %vm663 = vcmask 416768
  %664 = vst.msk [vmem:[#allocation4 + $0x10] sm:$0xff] %vm663, %v656
  %v665 = vld [vmem:[#allocation4] sm:$0xff]
  %v666 = vld [vmem:[#allocation4 + $0x8] sm:$0xff]
  %v667 = vld [vmem:[#allocation4 + $0x10] sm:$0xff]
  %668 = vst [vmem:[#allocation5] sm:$0xff] %v665
  %669 = vst [vmem:[#allocation5 + $0x8] sm:$0xff] %v666
  %670 = vst.msk [vmem:[#allocation5 + $0x10] sm:$0xff] %vm298, %v667
  %674 = vrot.lane.b32.xlu0 %v665, 127
  %v675 = vpop.permute.xlu0 %674
  %676 = vrot.lane.b32.xlu0 %v666, 127
  %v677 = vpop.permute.xlu0 %676
  %678 = vrot.lane.b32.xlu0 %v667, 127
  %v679 = vpop.permute.xlu0 %678
  %v680 = vsel %vm55, %v675, %v677
  %v681 = vsel %vm55, %v677, %v679
  %685 = vst [vmem:[#allocation5 + $0x18] sm:$0xff] %v680
  %686 = vst [vmem:[#allocation5 + $0x20] sm:$0xff] %v681
  %687 = vst.msk [vmem:[#allocation5 + $0x28] sm:$0xff] %vm298, %v679
  %688 = vrot.lane.b32.xlu0 %v665, 126
  %v689 = vpop.permute.xlu0 %688
  %690 = vrot.lane.b32.xlu0 %v666, 126
  %v691 = vpop.permute.xlu0 %690
  %692 = vrot.lane.b32.xlu0 %v667, 126
  %v693 = vpop.permute.xlu0 %692
  %v694 = vsel %vm71, %v689, %v691
  %v695 = vsel %vm71, %v691, %v693
  %699 = vst [vmem:[#allocation5 + $0x30] sm:$0xff] %v694
  %700 = vst [vmem:[#allocation5 + $0x38] sm:$0xff] %v695
  %701 = vst.msk [vmem:[#allocation5 + $0x40] sm:$0xff] %vm298, %v693
  %702 = vrot.lane.b32.xlu0 %v665, 110
  %v703 = vpop.permute.xlu0 %702
  %704 = vrot.lane.b32.xlu0 %v666, 110
  %v705 = vpop.permute.xlu0 %704
  %706 = vrot.lane.b32.xlu0 %v667, 110
  %v707 = vpop.permute.xlu0 %706
  %v708 = vsel %vm86, %v703, %v705
  %v709 = vsel %vm86, %v705, %v707
  %713 = vst [vmem:[#allocation5 + $0x48] sm:$0xff] %v708
  %714 = vst [vmem:[#allocation5 + $0x50] sm:$0xff] %v709
  %715 = vst.msk [vmem:[#allocation5 + $0x58] sm:$0xff] %vm298, %v707
  %716 = vrot.lane.b32.xlu0 %v665, 109
  %v717 = vpop.permute.xlu0 %716
  %718 = vrot.lane.b32.xlu0 %v666, 109
  %v719 = vpop.permute.xlu0 %718
  %720 = vrot.lane.b32.xlu0 %v667, 109
  %v721 = vpop.permute.xlu0 %720
  %v722 = vsel %vm101, %v717, %v719
  %v723 = vsel %vm101, %v719, %v721
  %727 = vst [vmem:[#allocation5 + $0x60] sm:$0xff] %v722
  %728 = vst [vmem:[#allocation5 + $0x68] sm:$0xff] %v723
  %729 = vst.msk [vmem:[#allocation5 + $0x70] sm:$0xff] %vm298, %v721
  %730 = vrot.lane.b32.xlu0 %v665, 108
  %v731 = vpop.permute.xlu0 %730
  %732 = vrot.lane.b32.xlu0 %v666, 108
  %v733 = vpop.permute.xlu0 %732
  %734 = vrot.lane.b32.xlu0 %v667, 108
  %v735 = vpop.permute.xlu0 %734
  %v736 = vsel %vm116, %v731, %v733
  %v737 = vsel %vm116, %v733, %v735
  %741 = vst [vmem:[#allocation5 + $0x78] sm:$0xff] %v736
  %742 = vst [vmem:[#allocation5 + $0x80] sm:$0xff] %v737
  %743 = vst.msk [vmem:[#allocation5 + $0x88] sm:$0xff] %vm298, %v735
  %744 = vrot.lane.b32.xlu0 %v665, 92
  %v745 = vpop.permute.xlu0 %744
  %746 = vrot.lane.b32.xlu0 %v666, 92
  %v747 = vpop.permute.xlu0 %746
  %748 = vrot.lane.b32.xlu0 %v667, 92
  %v749 = vpop.permute.xlu0 %748
  %v750 = vsel %vm131, %v745, %v747
  %v751 = vsel %vm131, %v747, %v749
  %755 = vst [vmem:[#allocation5 + $0x90] sm:$0xff] %v750
  %756 = vst [vmem:[#allocation5 + $0x98] sm:$0xff] %v751
  %757 = vst.msk [vmem:[#allocation5 + $0xa0] sm:$0xff] %vm298, %v749
  %758 = vrot.lane.b32.xlu0 %v665, 91
  %v759 = vpop.permute.xlu0 %758
  %760 = vrot.lane.b32.xlu0 %v666, 91
  %v761 = vpop.permute.xlu0 %760
  %762 = vrot.lane.b32.xlu0 %v667, 91
  %v763 = vpop.permute.xlu0 %762
  %v764 = vsel %vm146, %v759, %v761
  %v765 = vsel %vm146, %v761, %v763
  %769 = vst [vmem:[#allocation5 + $0xa8] sm:$0xff] %v764
  %770 = vst [vmem:[#allocation5 + $0xb0] sm:$0xff] %v765
  %771 = vst.msk [vmem:[#allocation5 + $0xb8] sm:$0xff] %vm298, %v763
  %772 = vrot.lane.b32.xlu0 %v665, 90
  %v773 = vpop.permute.xlu0 %772
  %774 = vrot.lane.b32.xlu0 %v666, 90
  %v775 = vpop.permute.xlu0 %774
  %776 = vrot.lane.b32.xlu0 %v667, 90
  %v777 = vpop.permute.xlu0 %776
  %v778 = vsel %vm161, %v773, %v775
  %v779 = vsel %vm161, %v775, %v777
  %783 = vst [vmem:[#allocation5 + $0xc0] sm:$0xff] %v778
  %784 = vst [vmem:[#allocation5 + $0xc8] sm:$0xff] %v779
  %785 = vst.msk [vmem:[#allocation5 + $0xd0] sm:$0xff] %vm298, %v777
  %v786 = vld [vmem:[#allocation5] sm:$0xff]
  %v787 = vld [vmem:[#allocation5 + $0x8] sm:$0xff]
  %v788 = vld [vmem:[#allocation5 + $0x10] sm:$0xff]
  %v789 = vld [vmem:[#allocation5 + $0x18] sm:$0xff]
  %v790 = vld [vmem:[#allocation5 + $0x20] sm:$0xff]
  %v791 = vld [vmem:[#allocation5 + $0x28] sm:$0xff]
  %v792 = vld [vmem:[#allocation5 + $0x30] sm:$0xff]
  %v793 = vld [vmem:[#allocation5 + $0x38] sm:$0xff]
  %v794 = vld [vmem:[#allocation5 + $0x40] sm:$0xff]
  %v795 = vld [vmem:[#allocation5 + $0x48] sm:$0xff]
  %v796 = vld [vmem:[#allocation5 + $0x50] sm:$0xff]
  %v797 = vld [vmem:[#allocation5 + $0x58] sm:$0xff]
  %v798 = vld [vmem:[#allocation5 + $0x60] sm:$0xff]
  %v799 = vld [vmem:[#allocation5 + $0x68] sm:$0xff]
  %v800 = vld [vmem:[#allocation5 + $0x70] sm:$0xff]
  %v801 = vld [vmem:[#allocation5 + $0x78] sm:$0xff]
  %v802 = vld [vmem:[#allocation5 + $0x80] sm:$0xff]
  %v803 = vld [vmem:[#allocation5 + $0x88] sm:$0xff]
  %v804 = vld [vmem:[#allocation5 + $0x90] sm:$0xff]
  %v805 = vld [vmem:[#allocation5 + $0x98] sm:$0xff]
  %v806 = vld [vmem:[#allocation5 + $0xa0] sm:$0xff]
  %v807 = vld [vmem:[#allocation5 + $0xa8] sm:$0xff]
  %v808 = vld [vmem:[#allocation5 + $0xb0] sm:$0xff]
  %v809 = vld [vmem:[#allocation5 + $0xb8] sm:$0xff]
  %v810 = vld [vmem:[#allocation5 + $0xc0] sm:$0xff]
  %v811 = vld [vmem:[#allocation5 + $0xc8] sm:$0xff]
  %v812 = vld [vmem:[#allocation5 + $0xd0] sm:$0xff]
  %v813 = vpack.c.bf16 %v789, %v786
  %v814 = vpack.c.bf16 %v790, %v787
  %v815 = vpack.c.bf16 %v791, %v788
  %v816 = vpack.c.bf16 %v795, %v792
  %v817 = vpack.c.bf16 %v796, %v793
  %v818 = vpack.c.bf16 %v797, %v794
  %v819 = vpack.c.bf16 %v801, %v798
  %v820 = vpack.c.bf16 %v802, %v799
  %v821 = vpack.c.bf16 %v803, %v800
  %v822 = vpack.c.bf16 %v807, %v804
  %v823 = vpack.c.bf16 %v808, %v805
  %v824 = vpack.c.bf16 %v809, %v806
  %v825 = vpack.c.bf16 %v810, %v810
  %v826 = vpack.c.bf16 %v811, %v811
  %v827 = vpack.c.bf16 %v812, %v812
  %v828 = vld [vmem:[%s6] sm:$0xf]
  %v829 = vld [vmem:[%s7] sm:$0xff]
  %831 = vset.pattern.permute.xlu0 0
  %832 = vperm.xlu0 %831, %v829
  %v833 = vpop.permute.xlu0 %832
  %vm835 = vcmask 588800
  %v837 = vsel %vm835, %v828, 0
  %vm839 = vcmask 1043456
  %v841 = vsel %vm839, %v825, 0
  %v844 = vsel %vm839, %v826, 0
  %v847 = vsel %vm839, %v827, 0
  %849 = vmatprep.subr.bf16.mxu0 %v814
  %850 = vmatpush1.bf16.msra.mxu0 %v813
  %851 = vmatprep.subr.bf16.mxu0 %v817
  %852 = vmatpush1.bf16.msra.mxu0 %v816
  %853 = vmatprep.subr.bf16.mxu0 %v820
  %854 = vmatpush1.bf16.msra.mxu0 %v819
  %855 = vmatprep.subr.bf16.mxu0 %v823
  %856 = vmatpush1.bf16.msra.mxu0 %v822
  %857 = vmatprep.subr.bf16.mxu0 %v844
  %858 = vmatpush1.bf16.msra.mxu0 %v841
  %859 = vmatprep.subr.bf16.mxu0 0
  %860 = vmatpush1.bf16.msra.mxu0 0
  %861 = vmatprep.subr.bf16.mxu0 0
  %862 = vmatpush1.bf16.msra.mxu0 0
  %863 = vmatprep.subr.bf16.mxu0 0
  %864 = vmatpush1.bf16.msra.mxu0 0
  %865 = vmatprep.subr.bf16.mxu0 0
  %866 = vmatpush1.bf16.msra.mxu0 0
  %867 = vmatprep.subr.bf16.mxu0 0
  %868 = vmatpush1.bf16.msra.mxu0 0
  %869 = vmatprep.subr.bf16.mxu0 0
  %870 = vmatpush1.bf16.msra.mxu0 0
  %871 = vmatprep.subr.bf16.mxu0 0
  %872 = vmatpush1.bf16.msra.mxu0 0
  %873 = vmatprep.subr.bf16.mxu0 0
  %874 = vmatpush1.bf16.msra.mxu0 0
  %875 = vmatprep.subr.bf16.mxu0 0
  %876 = vmatpush1.bf16.msra.mxu0 0
  %877 = vmatprep.subr.bf16.mxu0 0
  %878 = vmatpush1.bf16.msra.mxu0 0
  %879 = vmatprep.subr.bf16.mxu0 0
  %880 = vmatpush1.bf16.msra.mxu0 0
  %881 = vmatprep.mubr.bf16.mxu0 0
  %882 = vmatmul.mubr.bf16.gmra.mrb[0].mxu0 %v837
  %v883 = vpop.f32.mrb[0].mxu0
  %v884 = vadd.f32 %v833, %v883
  %v885 = vpop.f32.mrb[0].mxu0
  %v886 = vadd.f32 %v833, %v885
  %v887 = vpop.f32.mrb[0].mxu0
  %v888 = vpop.f32.mrb[0].mxu0
  %889 = vdwg.mxu0
  %890 = vmatprep.subr.bf16.mxu0 0
  %891 = vmatpush1.bf16.msra.mxu0 %v815
  %892 = vmatprep.subr.bf16.mxu0 0
  %893 = vmatpush1.bf16.msra.mxu0 %v818
  %894 = vmatprep.subr.bf16.mxu0 0
  %895 = vmatpush1.bf16.msra.mxu0 %v821
  %896 = vmatprep.subr.bf16.mxu0 0
  %897 = vmatpush1.bf16.msra.mxu0 %v824
  %898 = vmatprep.subr.bf16.mxu0 0
  %899 = vmatpush1.bf16.msra.mxu0 %v847
  %900 = vmatprep.subr.bf16.mxu0 0
  %901 = vmatpush1.bf16.msra.mxu0 0
  %902 = vmatprep.subr.bf16.mxu0 0
  %903 = vmatpush1.bf16.msra.mxu0 0
  %904 = vmatprep.subr.bf16.mxu0 0
  %905 = vmatpush1.bf16.msra.mxu0 0
  %906 = vmatprep.subr.bf16.mxu0 0
  %907 = vmatpush1.bf16.msra.mxu0 0
  %908 = vmatprep.subr.bf16.mxu0 0
  %909 = vmatpush1.bf16.msra.mxu0 0
  %910 = vmatprep.subr.bf16.mxu0 0
  %911 = vmatpush1.bf16.msra.mxu0 0
  %912 = vmatprep.subr.bf16.mxu0 0
  %913 = vmatpush1.bf16.msra.mxu0 0
  %914 = vmatprep.subr.bf16.mxu0 0
  %915 = vmatpush1.bf16.msra.mxu0 0
  %916 = vmatprep.subr.bf16.mxu0 0
  %917 = vmatpush1.bf16.msra.mxu0 0
  %918 = vmatprep.subr.bf16.mxu0 0
  %919 = vmatpush1.bf16.msra.mxu0 0
  %920 = vmatprep.subr.bf16.mxu0 0
  %921 = vmatpush1.bf16.msra.mxu0 0
  %922 = vmatprep.mubr.bf16.mxu0 0
  %923 = vmatmul.mubr.bf16.gmra.mrb[0].mxu0 %v837
  %v924 = vpop.f32.mrb[0].mxu0
  %v925 = vadd.f32 %v833, %v924
  %v926 = vpop.f32.mrb[0].mxu0
  %v927 = vpop.f32.mrb[0].mxu0
  %v928 = vpop.f32.mrb[0].mxu0
  %929 = vdwg.mxu0
  %930 = vst [vmem:[#allocation3] sm:$0xff] %v884
  %931 = vst [vmem:[#allocation3 + $0x8] sm:$0xff] %v886
  %932 = vst.msk [vmem:[#allocation3 + $0x10] sm:$0xff] %vm298, %v925
  %v933 = vmul.f32 %v884, %v304
  %v934 = vmul.f32 %v886, %v308
  %v935 = vmul.f32 %v925, %v312
  %v936 = vadd.f32 %v933, %v934
  %v937 = vsel %vm298, %v935, 0.0
  %v938 = vadd.f32 %v936, %v937
  %939 = vadd.xlane.f32.xlu0 %v938
  %v940 = vpop.xlane.xlu0 %939
  %v941 = vadd.f32 %v940, 0.0
  %v942 = vmul.f32 %v933, %v884
  %v943 = vmul.f32 %v934, %v886
  %v944 = vmul.f32 %v935, %v925
  %v945 = vadd.f32 %v942, %v943
  %v946 = vsel %vm298, %v944, 0.0
  %v947 = vadd.f32 %v945, %v946
  %948 = vadd.xlane.f32.xlu0 %v947
  %v949 = vpop.xlane.xlu0 %948
  %v950 = vadd.f32 %v949, 0.0
  %v951 = vld [vmem:[%s582] sm:$0xff]
  %v952 = vld [vmem:[%s582 + $0x8] sm:$0xff]
  %v953 = vld [vmem:[%s582 + $0x10] sm:$0xff]
  %v954 = vmul.f32 %v626, %v951
  %v955 = vmul.f32 %v626, %v952
  %v956 = vmul.f32 %v626, %v953
  %v957 = vadd.f32 %v954, %v634
  %v958 = vadd.f32 %v955, %v634
  %v959 = vadd.f32 %v956, %v634
  %v960 = vmax.f32 %v957, 0.0
  %v961 = vmax.f32 %v958, 0.0
  %v962 = vmax.f32 %v959, 0.0
  %v963 = vmul.f32 %v960, %v304
  %v964 = vmul.f32 %v961, %v308
  %v965 = vmul.f32 %v962, %v312
  %969 = vrot.lane.b32.xlu0 %v963, 19
  %v970 = vpop.permute.xlu0 %969
  %971 = vrot.lane.b32.xlu0 %v964, 19
  %v972 = vpop.permute.xlu0 %971
  %973 = vrot.lane.b32.xlu0 %v965, 19
  %v974 = vpop.permute.xlu0 %973
  %v975 = vsel %vm654, %v970, %v972
  %v976 = vsel %vm654, %v972, %v974
  %980 = vst.msk [vmem:[#allocation4] sm:$0xff] %vm660, %v970
  %981 = vst [vmem:[#allocation4 + $0x8] sm:$0xff] %v975
  %982 = vst.msk [vmem:[#allocation4 + $0x10] sm:$0xff] %vm663, %v976
  %v983 = vld [vmem:[#allocation4] sm:$0xff]
  %v984 = vld [vmem:[#allocation4 + $0x8] sm:$0xff]
  %v985 = vld [vmem:[#allocation4 + $0x10] sm:$0xff]
  %986 = vst [vmem:[#allocation5] sm:$0xff] %v983
  %987 = vst [vmem:[#allocation5 + $0x8] sm:$0xff] %v984
  %988 = vst.msk [vmem:[#allocation5 + $0x10] sm:$0xff] %vm298, %v985
  %992 = vrot.lane.b32.xlu0 %v983, 127
  %v993 = vpop.permute.xlu0 %992
  %994 = vrot.lane.b32.xlu0 %v984, 127
  %v995 = vpop.permute.xlu0 %994
  %996 = vrot.lane.b32.xlu0 %v985, 127
  %v997 = vpop.permute.xlu0 %996
  %v998 = vsel %vm55, %v993, %v995
  %v999 = vsel %vm55, %v995, %v997
  %1003 = vst [vmem:[#allocation5 + $0x18] sm:$0xff] %v998
  %1004 = vst [vmem:[#allocation5 + $0x20] sm:$0xff] %v999
  %1005 = vst.msk [vmem:[#allocation5 + $0x28] sm:$0xff] %vm298, %v997
  %1006 = vrot.lane.b32.xlu0 %v983, 126
  %v1007 = vpop.permute.xlu0 %1006
  %1008 = vrot.lane.b32.xlu0 %v984, 126
  %v1009 = vpop.permute.xlu0 %1008
  %1010 = vrot.lane.b32.xlu0 %v985, 126
  %v1011 = vpop.permute.xlu0 %1010
  %v1012 = vsel %vm71, %v1007, %v1009
  %v1013 = vsel %vm71, %v1009, %v1011
  %1017 = vst [vmem:[#allocation5 + $0x30] sm:$0xff] %v1012
  %1018 = vst [vmem:[#allocation5 + $0x38] sm:$0xff] %v1013
  %1019 = vst.msk [vmem:[#allocation5 + $0x40] sm:$0xff] %vm298, %v1011
  %1020 = vrot.lane.b32.xlu0 %v983, 110
  %v1021 = vpop.permute.xlu0 %1020
  %1022 = vrot.lane.b32.xlu0 %v984, 110
  %v1023 = vpop.permute.xlu0 %1022
  %1024 = vrot.lane.b32.xlu0 %v985, 110
  %v1025 = vpop.permute.xlu0 %1024
  %v1026 = vsel %vm86, %v1021, %v1023
  %v1027 = vsel %vm86, %v1023, %v1025
  %1031 = vst [vmem:[#allocation5 + $0x48] sm:$0xff] %v1026
  %1032 = vst [vmem:[#allocation5 + $0x50] sm:$0xff] %v1027
  %1033 = vst.msk [vmem:[#allocation5 + $0x58] sm:$0xff] %vm298, %v1025
  %1034 = vrot.lane.b32.xlu0 %v983, 109
  %v1035 = vpop.permute.xlu0 %1034
  %1036 = vrot.lane.b32.xlu0 %v984, 109
  %v1037 = vpop.permute.xlu0 %1036
  %1038 = vrot.lane.b32.xlu0 %v985, 109
  %v1039 = vpop.permute.xlu0 %1038
  %v1040 = vsel %vm101, %v1035, %v1037
  %v1041 = vsel %vm101, %v1037, %v1039
  %1045 = vst [vmem:[#allocation5 + $0x60] sm:$0xff] %v1040
  %1046 = vst [vmem:[#allocation5 + $0x68] sm:$0xff] %v1041
  %1047 = vst.msk [vmem:[#allocation5 + $0x70] sm:$0xff] %vm298, %v1039
  %1048 = vrot.lane.b32.xlu0 %v983, 108
  %v1049 = vpop.permute.xlu0 %1048
  %1050 = vrot.lane.b32.xlu0 %v984, 108
  %v1051 = vpop.permute.xlu0 %1050
  %1052 = vrot.lane.b32.xlu0 %v985, 108
  %v1053 = vpop.permute.xlu0 %1052
  %v1054 = vsel %vm116, %v1049, %v1051
  %v1055 = vsel %vm116, %v1051, %v1053
  %1059 = vst [vmem:[#allocation5 + $0x78] sm:$0xff] %v1054
  %1060 = vst [vmem:[#allocation5 + $0x80] sm:$0xff] %v1055
  %1061 = vst.msk [vmem:[#allocation5 + $0x88] sm:$0xff] %vm298, %v1053
  %1062 = vrot.lane.b32.xlu0 %v983, 92
  %v1063 = vpop.permute.xlu0 %1062
  %1064 = vrot.lane.b32.xlu0 %v984, 92
  %v1065 = vpop.permute.xlu0 %1064
  %1066 = vrot.lane.b32.xlu0 %v985, 92
  %v1067 = vpop.permute.xlu0 %1066
  %v1068 = vsel %vm131, %v1063, %v1065
  %v1069 = vsel %vm131, %v1065, %v1067
  %1073 = vst [vmem:[#allocation5 + $0x90] sm:$0xff] %v1068
  %1074 = vst [vmem:[#allocation5 + $0x98] sm:$0xff] %v1069
  %1075 = vst.msk [vmem:[#allocation5 + $0xa0] sm:$0xff] %vm298, %v1067
  %1076 = vrot.lane.b32.xlu0 %v983, 91
  %v1077 = vpop.permute.xlu0 %1076
  %1078 = vrot.lane.b32.xlu0 %v984, 91
  %v1079 = vpop.permute.xlu0 %1078
  %1080 = vrot.lane.b32.xlu0 %v985, 91
  %v1081 = vpop.permute.xlu0 %1080
  %v1082 = vsel %vm146, %v1077, %v1079
  %v1083 = vsel %vm146, %v1079, %v1081
  %1087 = vst [vmem:[#allocation5 + $0xa8] sm:$0xff] %v1082
  %1088 = vst [vmem:[#allocation5 + $0xb0] sm:$0xff] %v1083
  %1089 = vst.msk [vmem:[#allocation5 + $0xb8] sm:$0xff] %vm298, %v1081
  %1090 = vrot.lane.b32.xlu0 %v983, 90
  %v1091 = vpop.permute.xlu0 %1090
  %1092 = vrot.lane.b32.xlu0 %v984, 90
  %v1093 = vpop.permute.xlu0 %1092
  %1094 = vrot.lane.b32.xlu0 %v985, 90
  %v1095 = vpop.permute.xlu0 %1094
  %v1096 = vsel %vm161, %v1091, %v1093
  %v1097 = vsel %vm161, %v1093, %v1095
  %1101 = vst [vmem:[#allocation5 + $0xc0] sm:$0xff] %v1096
  %1102 = vst [vmem:[#allocation5 + $0xc8] sm:$0xff] %v1097
  %1103 = vst.msk [vmem:[#allocation5 + $0xd0] sm:$0xff] %vm298, %v1095
  %v1104 = vld [vmem:[#allocation5] sm:$0xff]
  %v1105 = vld [vmem:[#allocation5 + $0x8] sm:$0xff]
  %v1106 = vld [vmem:[#allocation5 + $0x10] sm:$0xff]
  %v1107 = vld [vmem:[#allocation5 + $0x18] sm:$0xff]
  %v1108 = vld [vmem:[#allocation5 + $0x20] sm:$0xff]
  %v1109 = vld [vmem:[#allocation5 + $0x28] sm:$0xff]
  %v1110 = vld [vmem:[#allocation5 + $0x30] sm:$0xff]
  %v1111 = vld [vmem:[#allocation5 + $0x38] sm:$0xff]
  %v1112 = vld [vmem:[#allocation5 + $0x40] sm:$0xff]
  %v1113 = vld [vmem:[#allocation5 + $0x48] sm:$0xff]
  %v1114 = vld [vmem:[#allocation5 + $0x50] sm:$0xff]
  %v1115 = vld [vmem:[#allocation5 + $0x58] sm:$0xff]
  %v1116 = vld [vmem:[#allocation5 + $0x60] sm:$0xff]
  %v1117 = vld [vmem:[#allocation5 + $0x68] sm:$0xff]
  %v1118 = vld [vmem:[#allocation5 + $0x70] sm:$0xff]
  %v1119 = vld [vmem:[#allocation5 + $0x78] sm:$0xff]
  %v1120 = vld [vmem:[#allocation5 + $0x80] sm:$0xff]
  %v1121 = vld [vmem:[#allocation5 + $0x88] sm:$0xff]
  %v1122 = vld [vmem:[#allocation5 + $0x90] sm:$0xff]
  %v1123 = vld [vmem:[#allocation5 + $0x98] sm:$0xff]
  %v1124 = vld [vmem:[#allocation5 + $0xa0] sm:$0xff]
  %v1125 = vld [vmem:[#allocation5 + $0xa8] sm:$0xff]
  %v1126 = vld [vmem:[#allocation5 + $0xb0] sm:$0xff]
  %v1127 = vld [vmem:[#allocation5 + $0xb8] sm:$0xff]
  %v1128 = vld [vmem:[#allocation5 + $0xc0] sm:$0xff]
  %v1129 = vld [vmem:[#allocation5 + $0xc8] sm:$0xff]
  %v1130 = vld [vmem:[#allocation5 + $0xd0] sm:$0xff]
  %v1131 = vpack.c.bf16 %v1107, %v1104
  %v1132 = vpack.c.bf16 %v1108, %v1105
  %v1133 = vpack.c.bf16 %v1109, %v1106
  %v1134 = vpack.c.bf16 %v1113, %v1110
  %v1135 = vpack.c.bf16 %v1114, %v1111
  %v1136 = vpack.c.bf16 %v1115, %v1112
  %v1137 = vpack.c.bf16 %v1119, %v1116
  %v1138 = vpack.c.bf16 %v1120, %v1117
  %v1139 = vpack.c.bf16 %v1121, %v1118
  %v1140 = vpack.c.bf16 %v1125, %v1122
  %v1141 = vpack.c.bf16 %v1126, %v1123
  %v1142 = vpack.c.bf16 %v1127, %v1124
  %v1143 = vpack.c.bf16 %v1128, %v1128
  %v1144 = vpack.c.bf16 %v1129, %v1129
  %v1145 = vpack.c.bf16 %v1130, %v1130
  %v1146 = vld [vmem:[%s6] sm:$0xf]
  %v1147 = vld [vmem:[%s7] sm:$0xff]
  %1149 = vset.pattern.permute.xlu0 0
  %1150 = vperm.xlu0 %1149, %v1147
  %v1151 = vpop.permute.xlu0 %1150
  %v1154 = vsel %vm835, %v1146, 0
  %v1157 = vsel %vm839, %v1143, 0
  %v1160 = vsel %vm839, %v1144, 0
  %v1163 = vsel %vm839, %v1145, 0
  %1165 = vmatprep.subr.bf16.mxu0 %v1132
  %1166 = vmatpush1.bf16.msra.mxu0 %v1131
  %1167 = vmatprep.subr.bf16.mxu0 %v1135
  %1168 = vmatpush1.bf16.msra.mxu0 %v1134
  %1169 = vmatprep.subr.bf16.mxu0 %v1138
  %1170 = vmatpush1.bf16.msra.mxu0 %v1137
  %1171 = vmatprep.subr.bf16.mxu0 %v1141
  %1172 = vmatpush1.bf16.msra.mxu0 %v1140
  %1173 = vmatprep.subr.bf16.mxu0 %v1160
  %1174 = vmatpush1.bf16.msra.mxu0 %v1157
  %1175 = vmatprep.subr.bf16.mxu0 0
  %1176 = vmatpush1.bf16.msra.mxu0 0
  %1177 = vmatprep.subr.bf16.mxu0 0
  %1178 = vmatpush1.bf16.msra.mxu0 0
  %1179 = vmatprep.subr.bf16.mxu0 0
  %1180 = vmatpush1.bf16.msra.mxu0 0
  %1181 = vmatprep.subr.bf16.mxu0 0
  %1182 = vmatpush1.bf16.msra.mxu0 0
  %1183 = vmatprep.subr.bf16.mxu0 0
  %1184 = vmatpush1.bf16.msra.mxu0 0
  %1185 = vmatprep.subr.bf16.mxu0 0
  %1186 = vmatpush1.bf16.msra.mxu0 0
  %1187 = vmatprep.subr.bf16.mxu0 0
  %1188 = vmatpush1.bf16.msra.mxu0 0
  %1189 = vmatprep.subr.bf16.mxu0 0
  %1190 = vmatpush1.bf16.msra.mxu0 0
  %1191 = vmatprep.subr.bf16.mxu0 0
  %1192 = vmatpush1.bf16.msra.mxu0 0
  %1193 = vmatprep.subr.bf16.mxu0 0
  %1194 = vmatpush1.bf16.msra.mxu0 0
  %1195 = vmatprep.subr.bf16.mxu0 0
  %1196 = vmatpush1.bf16.msra.mxu0 0
  %1197 = vmatprep.mubr.bf16.mxu0 0
  %1198 = vmatmul.mubr.bf16.gmra.mrb[0].mxu0 %v1154
  %v1199 = vpop.f32.mrb[0].mxu0
  %v1200 = vadd.f32 %v1151, %v1199
  %v1201 = vpop.f32.mrb[0].mxu0
  %v1202 = vadd.f32 %v1151, %v1201
  %v1203 = vpop.f32.mrb[0].mxu0
  %v1204 = vpop.f32.mrb[0].mxu0
  %1205 = vdwg.mxu0
  %1206 = vmatprep.subr.bf16.mxu0 0
  %1207 = vmatpush1.bf16.msra.mxu0 %v1133
  %1208 = vmatprep.subr.bf16.mxu0 0
  %1209 = vmatpush1.bf16.msra.mxu0 %v1136
  %1210 = vmatprep.subr.bf16.mxu0 0
  %1211 = vmatpush1.bf16.msra.mxu0 %v1139
  %1212 = vmatprep.subr.bf16.mxu0 0
  %1213 = vmatpush1.bf16.msra.mxu0 %v1142
  %1214 = vmatprep.subr.bf16.mxu0 0
  %1215 = vmatpush1.bf16.msra.mxu0 %v1163
  %1216 = vmatprep.subr.bf16.mxu0 0
  %1217 = vmatpush1.bf16.msra.mxu0 0
  %1218 = vmatprep.subr.bf16.mxu0 0
  %1219 = vmatpush1.bf16.msra.mxu0 0
  %1220 = vmatprep.subr.bf16.mxu0 0
  %1221 = vmatpush1.bf16.msra.mxu0 0
  %1222 = vmatprep.subr.bf16.mxu0 0
  %1223 = vmatpush1.bf16.msra.mxu0 0
  %1224 = vmatprep.subr.bf16.mxu0 0
  %1225 = vmatpush1.bf16.msra.mxu0 0
  %1226 = vmatprep.subr.bf16.mxu0 0
  %1227 = vmatpush1.bf16.msra.mxu0 0
  %1228 = vmatprep.subr.bf16.mxu0 0
  %1229 = vmatpush1.bf16.msra.mxu0 0
  %1230 = vmatprep.subr.bf16.mxu0 0
  %1231 = vmatpush1.bf16.msra.mxu0 0
  %1232 = vmatprep.subr.bf16.mxu0 0
  %1233 = vmatpush1.bf16.msra.mxu0 0
  %1234 = vmatprep.subr.bf16.mxu0 0
  %1235 = vmatpush1.bf16.msra.mxu0 0
  %1236 = vmatprep.subr.bf16.mxu0 0
  %1237 = vmatpush1.bf16.msra.mxu0 0
  %1238 = vmatprep.mubr.bf16.mxu0 0
  %1239 = vmatmul.mubr.bf16.gmra.mrb[0].mxu0 %v1154
  %v1240 = vpop.f32.mrb[0].mxu0
  %v1241 = vadd.f32 %v1151, %v1240
  %v1242 = vpop.f32.mrb[0].mxu0
  %v1243 = vpop.f32.mrb[0].mxu0
  %v1244 = vpop.f32.mrb[0].mxu0
  %1245 = vdwg.mxu0
  %s1246 = scalar_lea.vmem [#allocation3], 24
  %1247 = vst [vmem:[%s1246] sm:$0xff] %v1200
  %1248 = vst [vmem:[%s1246 + $0x8] sm:$0xff] %v1202
  %1249 = vst.msk [vmem:[%s1246 + $0x10] sm:$0xff] %vm298, %v1241
  %v1250 = vmul.f32 %v1200, %v304
  %v1251 = vmul.f32 %v1202, %v308
  %v1252 = vmul.f32 %v1241, %v312
  %v1253 = vadd.f32 %v1250, %v1251
  %v1254 = vsel %vm298, %v1252, 0.0
  %v1255 = vadd.f32 %v1253, %v1254
  %1256 = vadd.xlane.f32.xlu0 %v1255
  %v1257 = vpop.xlane.xlu0 %1256
  %v1258 = vadd.f32 %v941, %v1257
  %v1259 = vmul.f32 %v1250, %v1200
  %v1260 = vmul.f32 %v1251, %v1202
  %v1261 = vmul.f32 %v1252, %v1241
  %v1262 = vadd.f32 %v1259, %v1260
  %v1263 = vsel %vm298, %v1261, 0.0
  %v1264 = vadd.f32 %v1262, %v1263
  %1265 = vadd.xlane.f32.xlu0 %v1264
  %v1266 = vpop.xlane.xlu0 %1265
  %v1267 = vadd.f32 %v950, %v1266
  %v1268 = vmul.f32 %v1258, %v604
  %v1269 = vmul.f32 %v1267, %v604
  %v1270 = vmul.f32 %v1268, %v1268
  %v1271 = vsub.f32 %v1269, %v1270
  %v1272 = vmax.f32 %v1271, 0.0
  %v1273 = vld [vmem:[%s8] sm:$0xff]
  %v1274 = vadd.f32 %v1272, 1e-05
  %v1275 = vrsqrt.pop %v1274
  %v1276 = vmul.f32 %v1273, %v1275
  %v1277 = vld [vmem:[%s9] sm:$0xff]
  %v1278 = vmul.f32 %v1268, %v1276
  %v1279 = vsub.f32 %v1277, %v1278
  %v1280 = vld [vmem:[#allocation3] sm:$0xff]
  %v1281 = vld [vmem:[#allocation3 + $0x8] sm:$0xff]
  %v1282 = vld [vmem:[#allocation3 + $0x10] sm:$0xff]
  %1284 = vset.pattern.permute.xlu0 0
  %1285 = vperm.xlu0 %1284, %v1276
  %v1286 = vpop.permute.xlu0 %1285
  %v1288 = vmul.f32 %v1286, %v1280
  %v1289 = vmul.f32 %v1286, %v1281
  %v1290 = vmul.f32 %v1286, %v1282
  %1292 = vset.pattern.permute.xlu0 0
  %1293 = vperm.xlu0 %1292, %v1279
  %v1294 = vpop.permute.xlu0 %1293
  %v1296 = vadd.f32 %v1288, %v1294
  %v1297 = vadd.f32 %v1289, %v1294
  %v1298 = vadd.f32 %v1290, %v1294
  %v1299 = vmax.f32 %v1296, 0.0
  %v1300 = vmax.f32 %v1297, 0.0
  %v1301 = vmax.f32 %v1298, 0.0
  %1302 = vst [vmem:[%s10] sm:$0xff] %v1299
  %1303 = vst [vmem:[%s10 + $0x8] sm:$0xff] %v1300
  %1304 = vst.msk [vmem:[%s10 + $0x10] sm:$0xff] %vm298, %v1301
  %v1305 = vld [vmem:[%s1246] sm:$0xff]
  %v1306 = vld [vmem:[%s1246 + $0x8] sm:$0xff]
  %v1307 = vld [vmem:[%s1246 + $0x10] sm:$0xff]
  %v1308 = vmul.f32 %v1286, %v1305
  %v1309 = vmul.f32 %v1286, %v1306
  %v1310 = vmul.f32 %v1286, %v1307
  %v1311 = vadd.f32 %v1308, %v1294
  %v1312 = vadd.f32 %v1309, %v1294
  %v1313 = vadd.f32 %v1310, %v1294
  %v1314 = vmax.f32 %v1311, 0.0
  %v1315 = vmax.f32 %v1312, 0.0
  %v1316 = vmax.f32 %v1313, 0.0
  %s1317 = scalar_lea.vmem %s10, 24
  %1318 = vst [vmem:[%s1317] sm:$0xff] %v1314
  %1319 = vst [vmem:[%s1317 + $0x8] sm:$0xff] %v1315
  %1320 = vst.msk [vmem:[%s1317 + $0x10] sm:$0xff] %vm298, %v1316
  // Predicated region
  $region42: #{conv_two_forward.1} parent=0 // pred_check
    _
  $region43: #{conv_two_forward.1} parent=0 // pred_check_branch
    %1322 = sbr.rel (0) target = $region45
  $region44: #{conv_two_forward.1} parent=0 // pred_region
    _
  $region45: #{conv_two_forward.1} parent=0 // pred_fallthru
    _
  // Predicated region
  $region46: #{conv_two_forward.1} parent=0 // pred_check
    _
  $region47: #{conv_two_forward.1} parent=0 // pred_check_branch
    %1324 = sbr.rel (0) target = $region49
  $region48: #{conv_two_forward.1} parent=0 // pred_region
    _
  $region49: #{conv_two_forward.1} parent=0 // pred_fallthru
    _

</llo_original>
